<compile_context>
chip_gen: v7x
topology: tpu7x:2x2x1
jax: 0.10.0
libtpu: 0.0.40
codegen_flags: <defaults>
</compile_context>

<pallas_src>
import functools

import jax
import jax.numpy as jnp
from jax import lax
from jax.experimental import pallas as pl
from jax.experimental.pallas import tpu as pltpu

LANE = 128
# <= 48 MiB is safe on every generation (v7x has only 64 MiB physical VMEM per
# core); the per-step working set here is ~100 KB so a larger limit buys
# nothing.  For large shapes on v5e/v6e this could be raised toward ~96 MiB.
VMEM_LIMIT = 48 * 1024 * 1024


def _round_up(x, m):
    return ((x + m - 1) // m) * m


def _pick_bh(H, W):
    """Rows per grid step.

    Largest bh with H % bh == 0 whose output block lane width (bh*W) is a
    multiple of 128 (unmasked, lane-dense stores) while still leaving >= 2
    H-blocks per image, so the total grid (N * H/bh) has >= 4 steps: enough
    for the BlockSpec pipeline to hide DMA behind compute and (on v7x) for
    megacore to shard the grid across both TensorCores.  Falls back to bh = H
    (legal: the block then spans the full H*W axis).
    """
    cands = [bh for bh in range(1, H)
             if H % bh == 0 and (bh * W) % LANE == 0 and H // bh >= 2]
    return max(cands) if cands else H


# ---------------------------------------------------------------------------
# Pass 1: 3x3 conv as one small, natively-aligned im2col matmul per block,
# plus per-block BatchNorm partial statistics computed while the conv output
# is still in VMEM (saves an extra HBM pass over y).
# ---------------------------------------------------------------------------
def _conv_stats_kernel(x_ref, wt_ref, y_ref, stats_ref, patch_ref, *,
                       Cin, Cout, W, KH, KW, bh, K_pad):
    # x_ref:     (1, Cin, Hp, Wp)   halo-padded image of one batch element
    # wt_ref:    (Cout, K_pad)      weights, zero-padded along K
    # y_ref:     (1, Cout, bh*W)    conv output block (lane-dense)
    # stats_ref: (1, 1, Cout, 2)    per-block [channel sum, centered M2]
    # patch_ref: (K_pad, bh*W)      VMEM scratch: im2col patch matrix
    M = bh * W
    h0 = pl.multiple_of(pl.program_id(1) * bh, bh)

    # One dynamic-offset load of the rows this block needs (bh + halo).
    xwin = x_ref[0, :, pl.ds(h0, bh + KH - 1), :]            # (Cin, bh+2, Wp)

    # Build patches^T (K_pad, bh*W) directly in a preallocated VMEM scratch
    # (no reshape/concatenate copies).  Rows >= KH*KW*Cin stay zero; they meet
    # zero weight columns, so they contribute nothing.
    patch_ref[...] = jnp.zeros((K_pad, M), jnp.float32)
    for kh in range(KH):
        for kw in range(KW):
            t = kh * KW + kw
            for r in range(bh):
                piece = xwin[:, r + kh, kw:kw + W]            # (Cin, W)
                patch_ref[t * Cin:(t + 1) * Cin, r * W:(r + 1) * W] = piece

    # Single natively-aligned MXU matmul: (Cout, K_pad) @ (K_pad, bh*W) with
    # f32 accumulation.  (bf16 operands would break the 1e-4 check; the FLOPs
    # here are negligible anyway.)  Conv bias intentionally omitted: it is
    # exactly cancelled by the training-mode BatchNorm mean subtraction.
    acc = jnp.dot(wt_ref[...], patch_ref[...],
                  preferred_element_type=jnp.float32)         # (Cout, bh*W)
    y_ref[0] = acc.astype(y_ref.dtype)

    # Per-block BN partials while acc is still in VMEM: channel sum + centered
    # M2 (combined across blocks with Chan's formula outside the kernel).
    s = jnp.sum(acc, axis=1, keepdims=True)                   # (Cout, 1)
    d = acc - s * (1.0 / M)
    m2 = jnp.sum(d * d, axis=1, keepdims=True)                # (Cout, 1)
    stats_ref[0, 0, :, 0:1] = s
    stats_ref[0, 0, :, 1:2] = m2


def conv2d_stats_pallas(xp, wt, *, N, Cin, Cout, H, W, KH, KW, bh, K_pad):
    Hp, Wp = xp.shape[2], xp.shape[3]
    nhb = H // bh
    M = bh * W
    kernel = functools.partial(
        _conv_stats_kernel, Cin=Cin, Cout=Cout, W=W, KH=KH, KW=KW, bh=bh,
        K_pad=K_pad)
    return pl.pallas_call(
        kernel,
        out_shape=(
            jax.ShapeDtypeStruct((N, Cout, H * W), jnp.float32),
            jax.ShapeDtypeStruct((N, nhb, Cout, 2), jnp.float32),
        ),
        grid=(N, nhb),
        in_specs=[
            # Whole padded image of one batch element (~5 KB).  Its block
            # index only changes with n (the outer grid axis), so Pallas
            # re-uses the copy across the inner h steps.
            pl.BlockSpec((1, Cin, Hp, Wp), lambda n, h: (n, 0, 0, 0)),
            # Weight block is constant across the grid (tiny: Cout x 128 f32,
            # so double-buffering overhead is negligible).
            pl.BlockSpec((Cout, K_pad), lambda n, h: (0, 0)),
        ],
        out_specs=(
            pl.BlockSpec((1, Cout, M), lambda n, h: (n, 0, h)),
            pl.BlockSpec((1, 1, Cout, 2), lambda n, h: (n, h, 0, 0)),
        ),
        scratch_shapes=[pltpu.VMEM((K_pad, M), jnp.float32)],
        compiler_params=pltpu.CompilerParams(
            dimension_semantics=("parallel", "parallel"),
            vmem_limit_bytes=VMEM_LIMIT),
    )(xp, wt)


# ---------------------------------------------------------------------------
# Pass 2: apply folded BN scale/shift + ReLU (stats already reduced outside).
# ---------------------------------------------------------------------------
def _bn_relu_kernel(y_ref, aff_ref, o_ref):
    scale = aff_ref[:, 0:1]                                   # (Cout, 1)
    shift = aff_ref[:, 1:2]                                   # (Cout, 1)
    o_ref[...] = jnp.maximum(y_ref[...] * scale + shift, 0.0).astype(o_ref.dtype)


def bn_relu_pallas(y, affine, *, bh, W):
    N, Cout, HW = y.shape
    M = bh * W
    nhb = HW // M
    return pl.pallas_call(
        _bn_relu_kernel,
        out_shape=jax.ShapeDtypeStruct((N, Cout, HW), jnp.float32),
        grid=(N, nhb),
        in_specs=[
            pl.BlockSpec((1, Cout, M), lambda n, h: (n, 0, h)),
            pl.BlockSpec((Cout, 2), lambda n, h: (0, 0)),
        ],
        out_specs=pl.BlockSpec((1, Cout, M), lambda n, h: (n, 0, h)),
        compiler_params=pltpu.CompilerParams(
            dimension_semantics=("parallel", "parallel"),
            vmem_limit_bytes=VMEM_LIMIT),
    )(y, affine)


# ---------------------------------------------------------------------------
# ConvBlock forward (NCHW in / NCHW out, matching the PyTorch module).
# Assumes the module defaults: kernel_size=3, padding=1, stride=1.
# ---------------------------------------------------------------------------
def conv_block_forward(x_nchw, params, eps=1e-5):
    w = params["w"]                                   # (KH, KW, Cin, Cout)
    gamma, beta = params["gamma"], params["beta"]
    N, Cin, H, W = x_nchw.shape
    KH, KW, _, Cout = w.shape
    pad = 1

    bh = _pick_bh(H, W)
    K = KH * KW * Cin
    K_pad = _round_up(K, LANE)        # combined im2col K padded once (36->128)

    # Only a 1-px halo pad; no channel padding, no NCHW<->NHWC transposes.
    xp = jnp.pad(x_nchw, ((0, 0), (0, 0), (pad, pad), (pad, pad)))

    # Weight as (Cout, K_pad): rows = out channel, cols = (kh, kw, ci) taps,
    # zero-padded so the MXU contraction is natively aligned.  Bias is dropped
    # (exact under training-mode BatchNorm; see kernel comment).
    wt = jnp.pad(w.reshape(K, Cout).T, ((0, 0), (0, K_pad - K)))

    # Pass 1: conv + per-block BN partial stats (y read back only once more).
    y, blk_stats = conv2d_stats_pallas(
        xp, wt, N=N, Cin=Cin, Cout=Cout, H=H, W=W, KH=KH, KW=KW,
        bh=bh, K_pad=K_pad)

    # Tiny O(C) combine of per-block stats with Chan's parallel-variance
    # formula (numerically stable, unlike E[x^2]-E[x]^2).
    s_blk = blk_stats[..., 0]                         # (N, nhb, Cout)
    m2_blk = blk_stats[..., 1]
    cnt_b = float(bh * W)
    total = float(N * H * W)
    mean = jnp.sum(s_blk, axis=(0, 1)) / total        # (Cout,)
    mean_b = s_blk / cnt_b
    m2_tot = jnp.sum(m2_blk, axis=(0, 1)) + cnt_b * jnp.sum(
        (mean_b - mean[None, None, :]) ** 2, axis=(0, 1))
    var = m2_tot / total                               # biased var (PyTorch BN)
    rstd = lax.rsqrt(var + eps)
    scale = gamma * rstd
    shift = beta - mean * scale
    affine = jnp.stack([scale, shift], axis=1)         # (Cout, 2)

    # Pass 2: normalize + ReLU.
    out_flat = bn_relu_pallas(y, affine, bh=bh, W=W)

    # Metadata-only reshape back to NCHW (the layout is already contiguous).
    return out_flat.reshape(N, Cout, H, W)


# ---------------------------------------------------------------------------
# Params / reference
# ---------------------------------------------------------------------------
def init_params(key, in_channels, out_channels, kernel_size=3):
    k_w, k_b = jax.random.split(key)
    fan_in = in_channels * kernel_size * kernel_size
    bound = 1.0 / jnp.sqrt(fan_in)
    w = jax.random.uniform(
        k_w, (kernel_size, kernel_size, in_channels, out_channels),
        jnp.float32, -bound, bound)
    b = jax.random.uniform(k_b, (out_channels,), jnp.float32, -bound, bound)
    gamma = jnp.ones((out_channels,), jnp.float32)   # BatchNorm2d init
    beta = jnp.zeros((out_channels,), jnp.float32)
    return {"w": w, "b": b, "gamma": gamma, "beta": beta}


def reference_forward(x_nchw, params, eps=1e-5):
    # pure-JAX reference (XLA conv) for correctness check
    y = lax.conv_general_dilated(
        x_nchw, params["w"],
        window_strides=(1, 1), padding=((1, 1), (1, 1)),
        dimension_numbers=("NCHW", "HWIO", "NCHW"),
        precision=lax.Precision.HIGHEST)
    y = y + params["b"][None, :, None, None]
    mean = jnp.mean(y, axis=(0, 2, 3), keepdims=True)
    var = jnp.mean((y - mean) ** 2, axis=(0, 2, 3), keepdims=True)
    y_hat = (y - mean) * lax.rsqrt(var + eps)
    out = y_hat * params["gamma"][None, :, None, None] + \
        params["beta"][None, :, None, None]
    return jnp.maximum(out, 0.0)


if __name__ == "__main__":
    key = jax.random.PRNGKey(0)
    k_x, k_p = jax.random.split(key)

    N, Cin, Hs, Ws = 2, 4, 16, 16
    Cout = 8

    x = jax.random.normal(k_x, (N, Cin, Hs, Ws), jnp.float32)
    params = init_params(k_p, Cin, Cout)

    fwd = jax.jit(conv_block_forward)
    out = jax.block_until_ready(fwd(x, params))

    ref = reference_forward(x, params)
    assert out.shape == (N, Cout, Hs, Ws)
    err = float(jnp.max(jnp.abs(out - ref)))
    assert jnp.allclose(out, ref, atol=1e-4, rtol=1e-4), f"max abs err {err}"

    print("KERNEL_OK")
</pallas_src>

<mosaic_0001>
module attributes {stable_mosaic.version = 11 : i64} {
  func.func @_conv_stats_kernel(%arg0: i32, %arg1: i32, %arg2: memref<1x4x18x18xf32, #tpu.memory_space<vmem>>, %arg3: memref<8x128xf32, #tpu.memory_space<vmem>>, %arg4: memref<1x8x128xf32, #tpu.memory_space<vmem>>, %arg5: memref<1x1x8x2xf32, #tpu.memory_space<vmem>>, %arg6: memref<128x128xf32, #tpu.memory_space<vmem>>) attributes {dimension_semantics = [#tpu.dimension_semantics<parallel>, #tpu.dimension_semantics<parallel>], iteration_bounds = array<i64: 2, 2>, scalar_prefetch = 0 : i64, scratch_operands = 1 : i64, tpu.core_type = #tpu.core_type<tc>, window_params = [{transform_indices = @transform_0, window_bounds = array<i64: 1, 4, 18, 18>}, {pipeline_mode = #tpu.pipeline_mode<synchronous>, transform_indices = @transform_1, window_bounds = array<i64: 8, 128>}, {transform_indices = @transform_2, window_bounds = array<i64: 1, 8, 128>}, {transform_indices = @transform_3, window_bounds = array<i64: 1, 1, 8, 2>}]} {
    %c8_i32 = arith.constant 8 : i32
    %0 = arith.muli %arg1, %c8_i32 : i32
    %1 = tpu.assume_multiple %0, 8 : i32
    %c0 = arith.constant 0 : index
    %c0_0 = arith.constant 0 : index
    %2 = arith.index_cast %1 : i32 to index
    %c0_1 = arith.constant 0 : index
    %3 = vector.load %arg2[%c0, %c0_0, %2, %c0_1] : memref<1x4x18x18xf32, #tpu.memory_space<vmem>>, vector<1x4x10x18xf32>
    %4 = vector.shape_cast %3 : vector<1x4x10x18xf32> to vector<4x10x18xf32>
    %cst = arith.constant 0.000000e+00 : f32
    %5 = vector.broadcast %cst : f32 to vector<128x128xf32>
    %c0_2 = arith.constant 0 : index
    %c0_3 = arith.constant 0 : index
    %6 = vector.load %arg6[%c0_2, %c0_3] : memref<128x128xf32, #tpu.memory_space<vmem>>, vector<128x128xf32>
    tpu.vector_store %arg6[%c0_2, %c0_3], %5 {strides = array<i32>} : memref<128x128xf32, #tpu.memory_space<vmem>>, vector<128x128xf32>,
    %7 = vector.extract_strided_slice %4 {offsets = [0, 0, 0], sizes = [4, 1, 16], strides = [1, 1, 1]} : vector<4x10x18xf32> to vector<4x1x16xf32>
    %8 = vector.shape_cast %7 : vector<4x1x16xf32> to vector<4x16xf32>
    %c0_4 = arith.constant 0 : index
    %c0_5 = arith.constant 0 : index
    %9 = vector.load %arg6[%c0_4, %c0_5] : memref<128x128xf32, #tpu.memory_space<vmem>>, vector<4x16xf32>
    tpu.vector_store %arg6[%c0_4, %c0_5], %8 {strides = array<i32>} : memref<128x128xf32, #tpu.memory_space<vmem>>, vector<4x16xf32>,
    %10 = vector.extract_strided_slice %4 {offsets = [0, 1, 0], sizes = [4, 1, 16], strides = [1, 1, 1]} : vector<4x10x18xf32> to vector<4x1x16xf32>
    %11 = vector.shape_cast %10 : vector<4x1x16xf32> to vector<4x16xf32>
    %c0_6 = arith.constant 0 : index
    %c16 = arith.constant 16 : index
    %12 = vector.load %arg6[%c0_6, %c16] : memref<128x128xf32, #tpu.memory_space<vmem>>, vector<4x16xf32>
    tpu.vector_store %arg6[%c0_6, %c16], %11 {strides = array<i32>} : memref<128x128xf32, #tpu.memory_space<vmem>>, vector<4x16xf32>,
    %13 = vector.extract_strided_slice %4 {offsets = [0, 2, 0], sizes = [4, 1, 16], strides = [1, 1, 1]} : vector<4x10x18xf32> to vector<4x1x16xf32>
    %14 = vector.shape_cast %13 : vector<4x1x16xf32> to vector<4x16xf32>
    %c0_7 = arith.constant 0 : index
    %c32 = arith.constant 32 : index
    %15 = vector.load %arg6[%c0_7, %c32] : memref<128x128xf32, #tpu.memory_space<vmem>>, vector<4x16xf32>
    tpu.vector_store %arg6[%c0_7, %c32], %14 {strides = array<i32>} : memref<128x128xf32, #tpu.memory_space<vmem>>, vector<4x16xf32>,
    %16 = vector.extract_strided_slice %4 {offsets = [0, 3, 0], sizes = [4, 1, 16], strides = [1, 1, 1]} : vector<4x10x18xf32> to vector<4x1x16xf32>
    %17 = vector.shape_cast %16 : vector<4x1x16xf32> to vector<4x16xf32>
    %c0_8 = arith.constant 0 : index
    %c48 = arith.constant 48 : index
    %18 = vector.load %arg6[%c0_8, %c48] : memref<128x128xf32, #tpu.memory_space<vmem>>, vector<4x16xf32>
    tpu.vector_store %arg6[%c0_8, %c48], %17 {strides = array<i32>} : memref<128x128xf32, #tpu.memory_space<vmem>>, vector<4x16xf32>,
    %19 = vector.extract_strided_slice %4 {offsets = [0, 4, 0], sizes = [4, 1, 16], strides = [1, 1, 1]} : vector<4x10x18xf32> to vector<4x1x16xf32>
    %20 = vector.shape_cast %19 : vector<4x1x16xf32> to vector<4x16xf32>
    %c0_9 = arith.constant 0 : index
    %c64 = arith.constant 64 : index
    %21 = vector.load %arg6[%c0_9, %c64] : memref<128x128xf32, #tpu.memory_space<vmem>>, vector<4x16xf32>
    tpu.vector_store %arg6[%c0_9, %c64], %20 {strides = array<i32>} : memref<128x128xf32, #tpu.memory_space<vmem>>, vector<4x16xf32>,
    %22 = vector.extract_strided_slice %4 {offsets = [0, 5, 0], sizes = [4, 1, 16], strides = [1, 1, 1]} : vector<4x10x18xf32> to vector<4x1x16xf32>
    %23 = vector.shape_cast %22 : vector<4x1x16xf32> to vector<4x16xf32>
    %c0_10 = arith.constant 0 : index
    %c80 = arith.constant 80 : index
    %24 = vector.load %arg6[%c0_10, %c80] : memref<128x128xf32, #tpu.memory_space<vmem>>, vector<4x16xf32>
    tpu.vector_store %arg6[%c0_10, %c80], %23 {strides = array<i32>} : memref<128x128xf32, #tpu.memory_space<vmem>>, vector<4x16xf32>,
    %25 = vector.extract_strided_slice %4 {offsets = [0, 6, 0], sizes = [4, 1, 16], strides = [1, 1, 1]} : vector<4x10x18xf32> to vector<4x1x16xf32>
    %26 = vector.shape_cast %25 : vector<4x1x16xf32> to vector<4x16xf32>
    %c0_11 = arith.constant 0 : index
    %c96 = arith.constant 96 : index
    %27 = vector.load %arg6[%c0_11, %c96] : memref<128x128xf32, #tpu.memory_space<vmem>>, vector<4x16xf32>
    tpu.vector_store %arg6[%c0_11, %c96], %26 {strides = array<i32>} : memref<128x128xf32, #tpu.memory_space<vmem>>, vector<4x16xf32>,
    %28 = vector.extract_strided_slice %4 {offsets = [0, 7, 0], sizes = [4, 1, 16], strides = [1, 1, 1]} : vector<4x10x18xf32> to vector<4x1x16xf32>
    %29 = vector.shape_cast %28 : vector<4x1x16xf32> to vector<4x16xf32>
    %c0_12 = arith.constant 0 : index
    %c112 = arith.constant 112 : index
    %30 = vector.load %arg6[%c0_12, %c112] : memref<128x128xf32, #tpu.memory_space<vmem>>, vector<4x16xf32>
    tpu.vector_store %arg6[%c0_12, %c112], %29 {strides = array<i32>} : memref<128x128xf32, #tpu.memory_space<vmem>>, vector<4x16xf32>,
    %31 = vector.extract_strided_slice %4 {offsets = [0, 0, 1], sizes = [4, 1, 16], strides = [1, 1, 1]} : vector<4x10x18xf32> to vector<4x1x16xf32>
    %32 = vector.shape_cast %31 : vector<4x1x16xf32> to vector<4x16xf32>
    %c4 = arith.constant 4 : index
    %c0_13 = arith.constant 0 : index
    %33 = vector.load %arg6[%c4, %c0_13] : memref<128x128xf32, #tpu.memory_space<vmem>>, vector<4x16xf32>
    tpu.vector_store %arg6[%c4, %c0_13], %32 {strides = array<i32>} : memref<128x128xf32, #tpu.memory_space<vmem>>, vector<4x16xf32>,
    %34 = vector.extract_strided_slice %4 {offsets = [0, 1, 1], sizes = [4, 1, 16], strides = [1, 1, 1]} : vector<4x10x18xf32> to vector<4x1x16xf32>
    %35 = vector.shape_cast %34 : vector<4x1x16xf32> to vector<4x16xf32>
    %c4_14 = arith.constant 4 : index
    %c16_15 = arith.constant 16 : index
    %36 = vector.load %arg6[%c4_14, %c16_15] : memref<128x128xf32, #tpu.memory_space<vmem>>, vector<4x16xf32>
    tpu.vector_store %arg6[%c4_14, %c16_15], %35 {strides = array<i32>} : memref<128x128xf32, #tpu.memory_space<vmem>>, vector<4x16xf32>,
    %37 = vector.extract_strided_slice %4 {offsets = [0, 2, 1], sizes = [4, 1, 16], strides = [1, 1, 1]} : vector<4x10x18xf32> to vector<4x1x16xf32>
    %38 = vector.shape_cast %37 : vector<4x1x16xf32> to vector<4x16xf32>
    %c4_16 = arith.constant 4 : index
    %c32_17 = arith.constant 32 : index
    %39 = vector.load %arg6[%c4_16, %c32_17] : memref<128x128xf32, #tpu.memory_space<vmem>>, vector<4x16xf32>
    tpu.vector_store %arg6[%c4_16, %c32_17], %38 {strides = array<i32>} : memref<128x128xf32, #tpu.memory_space<vmem>>, vector<4x16xf32>,
    %40 = vector.extract_strided_slice %4 {offsets = [0, 3, 1], sizes = [4, 1, 16], strides = [1, 1, 1]} : vector<4x10x18xf32> to vector<4x1x16xf32>
    %41 = vector.shape_cast %40 : vector<4x1x16xf32> to vector<4x16xf32>
    %c4_18 = arith.constant 4 : index
    %c48_19 = arith.constant 48 : index
    %42 = vector.load %arg6[%c4_18, %c48_19] : memref<128x128xf32, #tpu.memory_space<vmem>>, vector<4x16xf32>
    tpu.vector_store %arg6[%c4_18, %c48_19], %41 {strides = array<i32>} : memref<128x128xf32, #tpu.memory_space<vmem>>, vector<4x16xf32>,
    %43 = vector.extract_strided_slice %4 {offsets = [0, 4, 1], sizes = [4, 1, 16], strides = [1, 1, 1]} : vector<4x10x18xf32> to vector<4x1x16xf32>
    %44 = vector.shape_cast %43 : vector<4x1x16xf32> to vector<4x16xf32>
    %c4_20 = arith.constant 4 : index
    %c64_21 = arith.constant 64 : index
    %45 = vector.load %arg6[%c4_20, %c64_21] : memref<128x128xf32, #tpu.memory_space<vmem>>, vector<4x16xf32>
    tpu.vector_store %arg6[%c4_20, %c64_21], %44 {strides = array<i32>} : memref<128x128xf32, #tpu.memory_space<vmem>>, vector<4x16xf32>,
    %46 = vector.extract_strided_slice %4 {offsets = [0, 5, 1], sizes = [4, 1, 16], strides = [1, 1, 1]} : vector<4x10x18xf32> to vector<4x1x16xf32>
    %47 = vector.shape_cast %46 : vector<4x1x16xf32> to vector<4x16xf32>
    %c4_22 = arith.constant 4 : index
    %c80_23 = arith.constant 80 : index
    %48 = vector.load %arg6[%c4_22, %c80_23] : memref<128x128xf32, #tpu.memory_space<vmem>>, vector<4x16xf32>
    tpu.vector_store %arg6[%c4_22, %c80_23], %47 {strides = array<i32>} : memref<128x128xf32, #tpu.memory_space<vmem>>, vector<4x16xf32>,
    %49 = vector.extract_strided_slice %4 {offsets = [0, 6, 1], sizes = [4, 1, 16], strides = [1, 1, 1]} : vector<4x10x18xf32> to vector<4x1x16xf32>
    %50 = vector.shape_cast %49 : vector<4x1x16xf32> to vector<4x16xf32>
    %c4_24 = arith.constant 4 : index
    %c96_25 = arith.constant 96 : index
    %51 = vector.load %arg6[%c4_24, %c96_25] : memref<128x128xf32, #tpu.memory_space<vmem>>, vector<4x16xf32>
    tpu.vector_store %arg6[%c4_24, %c96_25], %50 {strides = array<i32>} : memref<128x128xf32, #tpu.memory_space<vmem>>, vector<4x16xf32>,
    %52 = vector.extract_strided_slice %4 {offsets = [0, 7, 1], sizes = [4, 1, 16], strides = [1, 1, 1]} : vector<4x10x18xf32> to vector<4x1x16xf32>
    %53 = vector.shape_cast %52 : vector<4x1x16xf32> to vector<4x16xf32>
    %c4_26 = arith.constant 4 : index
    %c112_27 = arith.constant 112 : index
    %54 = vector.load %arg6[%c4_26, %c112_27] : memref<128x128xf32, #tpu.memory_space<vmem>>, vector<4x16xf32>
    tpu.vector_store %arg6[%c4_26, %c112_27], %53 {strides = array<i32>} : memref<128x128xf32, #tpu.memory_space<vmem>>, vector<4x16xf32>,
    %55 = vector.extract_strided_slice %4 {offsets = [0, 0, 2], sizes = [4, 1, 16], strides = [1, 1, 1]} : vector<4x10x18xf32> to vector<4x1x16xf32>
    %56 = vector.shape_cast %55 : vector<4x1x16xf32> to vector<4x16xf32>
    %c8 = arith.constant 8 : index
    %c0_28 = arith.constant 0 : index
    %57 = vector.load %arg6[%c8, %c0_28] : memref<128x128xf32, #tpu.memory_space<vmem>>, vector<4x16xf32>
    tpu.vector_store %arg6[%c8, %c0_28], %56 {strides = array<i32>} : memref<128x128xf32, #tpu.memory_space<vmem>>, vector<4x16xf32>,
    %58 = vector.extract_strided_slice %4 {offsets = [0, 1, 2], sizes = [4, 1, 16], strides = [1, 1, 1]} : vector<4x10x18xf32> to vector<4x1x16xf32>
    %59 = vector.shape_cast %58 : vector<4x1x16xf32> to vector<4x16xf32>
    %c8_29 = arith.constant 8 : index
    %c16_30 = arith.constant 16 : index
    %60 = vector.load %arg6[%c8_29, %c16_30] : memref<128x128xf32, #tpu.memory_space<vmem>>, vector<4x16xf32>
    tpu.vector_store %arg6[%c8_29, %c16_30], %59 {strides = array<i32>} : memref<128x128xf32, #tpu.memory_space<vmem>>, vector<4x16xf32>,
    %61 = vector.extract_strided_slice %4 {offsets = [0, 2, 2], sizes = [4, 1, 16], strides = [1, 1, 1]} : vector<4x10x18xf32> to vector<4x1x16xf32>
    %62 = vector.shape_cast %61 : vector<4x1x16xf32> to vector<4x16xf32>
    %c8_31 = arith.constant 8 : index
    %c32_32 = arith.constant 32 : index
    %63 = vector.load %arg6[%c8_31, %c32_32] : memref<128x128xf32, #tpu.memory_space<vmem>>, vector<4x16xf32>
    tpu.vector_store %arg6[%c8_31, %c32_32], %62 {strides = array<i32>} : memref<128x128xf32, #tpu.memory_space<vmem>>, vector<4x16xf32>,
    %64 = vector.extract_strided_slice %4 {offsets = [0, 3, 2], sizes = [4, 1, 16], strides = [1, 1, 1]} : vector<4x10x18xf32> to vector<4x1x16xf32>
    %65 = vector.shape_cast %64 : vector<4x1x16xf32> to vector<4x16xf32>
    %c8_33 = arith.constant 8 : index
    %c48_34 = arith.constant 48 : index
    %66 = vector.load %arg6[%c8_33, %c48_34] : memref<128x128xf32, #tpu.memory_space<vmem>>, vector<4x16xf32>
    tpu.vector_store %arg6[%c8_33, %c48_34], %65 {strides = array<i32>} : memref<128x128xf32, #tpu.memory_space<vmem>>, vector<4x16xf32>,
    %67 = vector.extract_strided_slice %4 {offsets = [0, 4, 2], sizes = [4, 1, 16], strides = [1, 1, 1]} : vector<4x10x18xf32> to vector<4x1x16xf32>
    %68 = vector.shape_cast %67 : vector<4x1x16xf32> to vector<4x16xf32>
    %c8_35 = arith.constant 8 : index
    %c64_36 = arith.constant 64 : index
    %69 = vector.load %arg6[%c8_35, %c64_36] : memref<128x128xf32, #tpu.memory_space<vmem>>, vector<4x16xf32>
    tpu.vector_store %arg6[%c8_35, %c64_36], %68 {strides = array<i32>} : memref<128x128xf32, #tpu.memory_space<vmem>>, vector<4x16xf32>,
    %70 = vector.extract_strided_slice %4 {offsets = [0, 5, 2], sizes = [4, 1, 16], strides = [1, 1, 1]} : vector<4x10x18xf32> to vector<4x1x16xf32>
    %71 = vector.shape_cast %70 : vector<4x1x16xf32> to vector<4x16xf32>
    %c8_37 = arith.constant 8 : index
    %c80_38 = arith.constant 80 : index
    %72 = vector.load %arg6[%c8_37, %c80_38] : memref<128x128xf32, #tpu.memory_space<vmem>>, vector<4x16xf32>
    tpu.vector_store %arg6[%c8_37, %c80_38], %71 {strides = array<i32>} : memref<128x128xf32, #tpu.memory_space<vmem>>, vector<4x16xf32>,
    %73 = vector.extract_strided_slice %4 {offsets = [0, 6, 2], sizes = [4, 1, 16], strides = [1, 1, 1]} : vector<4x10x18xf32> to vector<4x1x16xf32>
    %74 = vector.shape_cast %73 : vector<4x1x16xf32> to vector<4x16xf32>
    %c8_39 = arith.constant 8 : index
    %c96_40 = arith.constant 96 : index
    %75 = vector.load %arg6[%c8_39, %c96_40] : memref<128x128xf32, #tpu.memory_space<vmem>>, vector<4x16xf32>
    tpu.vector_store %arg6[%c8_39, %c96_40], %74 {strides = array<i32>} : memref<128x128xf32, #tpu.memory_space<vmem>>, vector<4x16xf32>,
    %76 = vector.extract_strided_slice %4 {offsets = [0, 7, 2], sizes = [4, 1, 16], strides = [1, 1, 1]} : vector<4x10x18xf32> to vector<4x1x16xf32>
    %77 = vector.shape_cast %76 : vector<4x1x16xf32> to vector<4x16xf32>
    %c8_41 = arith.constant 8 : index
    %c112_42 = arith.constant 112 : index
    %78 = vector.load %arg6[%c8_41, %c112_42] : memref<128x128xf32, #tpu.memory_space<vmem>>, vector<4x16xf32>
    tpu.vector_store %arg6[%c8_41, %c112_42], %77 {strides = array<i32>} : memref<128x128xf32, #tpu.memory_space<vmem>>, vector<4x16xf32>,
    %79 = vector.extract_strided_slice %4 {offsets = [0, 1, 0], sizes = [4, 1, 16], strides = [1, 1, 1]} : vector<4x10x18xf32> to vector<4x1x16xf32>
    %80 = vector.shape_cast %79 : vector<4x1x16xf32> to vector<4x16xf32>
    %c12 = arith.constant 12 : index
    %c0_43 = arith.constant 0 : index
    %81 = vector.load %arg6[%c12, %c0_43] : memref<128x128xf32, #tpu.memory_space<vmem>>, vector<4x16xf32>
    tpu.vector_store %arg6[%c12, %c0_43], %80 {strides = array<i32>} : memref<128x128xf32, #tpu.memory_space<vmem>>, vector<4x16xf32>,
    %82 = vector.extract_strided_slice %4 {offsets = [0, 2, 0], sizes = [4, 1, 16], strides = [1, 1, 1]} : vector<4x10x18xf32> to vector<4x1x16xf32>
    %83 = vector.shape_cast %82 : vector<4x1x16xf32> to vector<4x16xf32>
    %c12_44 = arith.constant 12 : index
    %c16_45 = arith.constant 16 : index
    %84 = vector.load %arg6[%c12_44, %c16_45] : memref<128x128xf32, #tpu.memory_space<vmem>>, vector<4x16xf32>
    tpu.vector_store %arg6[%c12_44, %c16_45], %83 {strides = array<i32>} : memref<128x128xf32, #tpu.memory_space<vmem>>, vector<4x16xf32>,
    %85 = vector.extract_strided_slice %4 {offsets = [0, 3, 0], sizes = [4, 1, 16], strides = [1, 1, 1]} : vector<4x10x18xf32> to vector<4x1x16xf32>
    %86 = vector.shape_cast %85 : vector<4x1x16xf32> to vector<4x16xf32>
    %c12_46 = arith.constant 12 : index
    %c32_47 = arith.constant 32 : index
    %87 = vector.load %arg6[%c12_46, %c32_47] : memref<128x128xf32, #tpu.memory_space<vmem>>, vector<4x16xf32>
    tpu.vector_store %arg6[%c12_46, %c32_47], %86 {strides = array<i32>} : memref<128x128xf32, #tpu.memory_space<vmem>>, vector<4x16xf32>,
    %88 = vector.extract_strided_slice %4 {offsets = [0, 4, 0], sizes = [4, 1, 16], strides = [1, 1, 1]} : vector<4x10x18xf32> to vector<4x1x16xf32>
    %89 = vector.shape_cast %88 : vector<4x1x16xf32> to vector<4x16xf32>
    %c12_48 = arith.constant 12 : index
    %c48_49 = arith.constant 48 : index
    %90 = vector.load %arg6[%c12_48, %c48_49] : memref<128x128xf32, #tpu.memory_space<vmem>>, vector<4x16xf32>
    tpu.vector_store %arg6[%c12_48, %c48_49], %89 {strides = array<i32>} : memref<128x128xf32, #tpu.memory_space<vmem>>, vector<4x16xf32>,
    %91 = vector.extract_strided_slice %4 {offsets = [0, 5, 0], sizes = [4, 1, 16], strides = [1, 1, 1]} : vector<4x10x18xf32> to vector<4x1x16xf32>
    %92 = vector.shape_cast %91 : vector<4x1x16xf32> to vector<4x16xf32>
    %c12_50 = arith.constant 12 : index
    %c64_51 = arith.constant 64 : index
    %93 = vector.load %arg6[%c12_50, %c64_51] : memref<128x128xf32, #tpu.memory_space<vmem>>, vector<4x16xf32>
    tpu.vector_store %arg6[%c12_50, %c64_51], %92 {strides = array<i32>} : memref<128x128xf32, #tpu.memory_space<vmem>>, vector<4x16xf32>,
    %94 = vector.extract_strided_slice %4 {offsets = [0, 6, 0], sizes = [4, 1, 16], strides = [1, 1, 1]} : vector<4x10x18xf32> to vector<4x1x16xf32>
    %95 = vector.shape_cast %94 : vector<4x1x16xf32> to vector<4x16xf32>
    %c12_52 = arith.constant 12 : index
    %c80_53 = arith.constant 80 : index
    %96 = vector.load %arg6[%c12_52, %c80_53] : memref<128x128xf32, #tpu.memory_space<vmem>>, vector<4x16xf32>
    tpu.vector_store %arg6[%c12_52, %c80_53], %95 {strides = array<i32>} : memref<128x128xf32, #tpu.memory_space<vmem>>, vector<4x16xf32>,
    %97 = vector.extract_strided_slice %4 {offsets = [0, 7, 0], sizes = [4, 1, 16], strides = [1, 1, 1]} : vector<4x10x18xf32> to vector<4x1x16xf32>
    %98 = vector.shape_cast %97 : vector<4x1x16xf32> to vector<4x16xf32>
    %c12_54 = arith.constant 12 : index
    %c96_55 = arith.constant 96 : index
    %99 = vector.load %arg6[%c12_54, %c96_55] : memref<128x128xf32, #tpu.memory_space<vmem>>, vector<4x16xf32>
    tpu.vector_store %arg6[%c12_54, %c96_55], %98 {strides = array<i32>} : memref<128x128xf32, #tpu.memory_space<vmem>>, vector<4x16xf32>,
    %100 = vector.extract_strided_slice %4 {offsets = [0, 8, 0], sizes = [4, 1, 16], strides = [1, 1, 1]} : vector<4x10x18xf32> to vector<4x1x16xf32>
    %101 = vector.shape_cast %100 : vector<4x1x16xf32> to vector<4x16xf32>
    %c12_56 = arith.constant 12 : index
    %c112_57 = arith.constant 112 : index
    %102 = vector.load %arg6[%c12_56, %c112_57] : memref<128x128xf32, #tpu.memory_space<vmem>>, vector<4x16xf32>
    tpu.vector_store %arg6[%c12_56, %c112_57], %101 {strides = array<i32>} : memref<128x128xf32, #tpu.memory_space<vmem>>, vector<4x16xf32>,
    %103 = vector.extract_strided_slice %4 {offsets = [0, 1, 1], sizes = [4, 1, 16], strides = [1, 1, 1]} : vector<4x10x18xf32> to vector<4x1x16xf32>
    %104 = vector.shape_cast %103 : vector<4x1x16xf32> to vector<4x16xf32>
    %c16_58 = arith.constant 16 : index
    %c0_59 = arith.constant 0 : index
    %105 = vector.load %arg6[%c16_58, %c0_59] : memref<128x128xf32, #tpu.memory_space<vmem>>, vector<4x16xf32>
    tpu.vector_store %arg6[%c16_58, %c0_59], %104 {strides = array<i32>} : memref<128x128xf32, #tpu.memory_space<vmem>>, vector<4x16xf32>,
    %106 = vector.extract_strided_slice %4 {offsets = [0, 2, 1], sizes = [4, 1, 16], strides = [1, 1, 1]} : vector<4x10x18xf32> to vector<4x1x16xf32>
    %107 = vector.shape_cast %106 : vector<4x1x16xf32> to vector<4x16xf32>
    %c16_60 = arith.constant 16 : index
    %c16_61 = arith.constant 16 : index
    %108 = vector.load %arg6[%c16_60, %c16_61] : memref<128x128xf32, #tpu.memory_space<vmem>>, vector<4x16xf32>
    tpu.vector_store %arg6[%c16_60, %c16_61], %107 {strides = array<i32>} : memref<128x128xf32, #tpu.memory_space<vmem>>, vector<4x16xf32>,
    %109 = vector.extract_strided_slice %4 {offsets = [0, 3, 1], sizes = [4, 1, 16], strides = [1, 1, 1]} : vector<4x10x18xf32> to vector<4x1x16xf32>
    %110 = vector.shape_cast %109 : vector<4x1x16xf32> to vector<4x16xf32>
    %c16_62 = arith.constant 16 : index
    %c32_63 = arith.constant 32 : index
    %111 = vector.load %arg6[%c16_62, %c32_63] : memref<128x128xf32, #tpu.memory_space<vmem>>, vector<4x16xf32>
    tpu.vector_store %arg6[%c16_62, %c32_63], %110 {strides = array<i32>} : memref<128x128xf32, #tpu.memory_space<vmem>>, vector<4x16xf32>,
    %112 = vector.extract_strided_slice %4 {offsets = [0, 4, 1], sizes = [4, 1, 16], strides = [1, 1, 1]} : vector<4x10x18xf32> to vector<4x1x16xf32>
    %113 = vector.shape_cast %112 : vector<4x1x16xf32> to vector<4x16xf32>
    %c16_64 = arith.constant 16 : index
    %c48_65 = arith.constant 48 : index
    %114 = vector.load %arg6[%c16_64, %c48_65] : memref<128x128xf32, #tpu.memory_space<vmem>>, vector<4x16xf32>
    tpu.vector_store %arg6[%c16_64, %c48_65], %113 {strides = array<i32>} : memref<128x128xf32, #tpu.memory_space<vmem>>, vector<4x16xf32>,
    %115 = vector.extract_strided_slice %4 {offsets = [0, 5, 1], sizes = [4, 1, 16], strides = [1, 1, 1]} : vector<4x10x18xf32> to vector<4x1x16xf32>
    %116 = vector.shape_cast %115 : vector<4x1x16xf32> to vector<4x16xf32>
    %c16_66 = arith.constant 16 : index
    %c64_67 = arith.constant 64 : index
    %117 = vector.load %arg6[%c16_66, %c64_67] : memref<128x128xf32, #tpu.memory_space<vmem>>, vector<4x16xf32>
    tpu.vector_store %arg6[%c16_66, %c64_67], %116 {strides = array<i32>} : memref<128x128xf32, #tpu.memory_space<vmem>>, vector<4x16xf32>,
    %118 = vector.extract_strided_slice %4 {offsets = [0, 6, 1], sizes = [4, 1, 16], strides = [1, 1, 1]} : vector<4x10x18xf32> to vector<4x1x16xf32>
    %119 = vector.shape_cast %118 : vector<4x1x16xf32> to vector<4x16xf32>
    %c16_68 = arith.constant 16 : index
    %c80_69 = arith.constant 80 : index
    %120 = vector.load %arg6[%c16_68, %c80_69] : memref<128x128xf32, #tpu.memory_space<vmem>>, vector<4x16xf32>
    tpu.vector_store %arg6[%c16_68, %c80_69], %119 {strides = array<i32>} : memref<128x128xf32, #tpu.memory_space<vmem>>, vector<4x16xf32>,
    %121 = vector.extract_strided_slice %4 {offsets = [0, 7, 1], sizes = [4, 1, 16], strides = [1, 1, 1]} : vector<4x10x18xf32> to vector<4x1x16xf32>
    %122 = vector.shape_cast %121 : vector<4x1x16xf32> to vector<4x16xf32>
    %c16_70 = arith.constant 16 : index
    %c96_71 = arith.constant 96 : index
    %123 = vector.load %arg6[%c16_70, %c96_71] : memref<128x128xf32, #tpu.memory_space<vmem>>, vector<4x16xf32>
    tpu.vector_store %arg6[%c16_70, %c96_71], %122 {strides = array<i32>} : memref<128x128xf32, #tpu.memory_space<vmem>>, vector<4x16xf32>,
    %124 = vector.extract_strided_slice %4 {offsets = [0, 8, 1], sizes = [4, 1, 16], strides = [1, 1, 1]} : vector<4x10x18xf32> to vector<4x1x16xf32>
    %125 = vector.shape_cast %124 : vector<4x1x16xf32> to vector<4x16xf32>
    %c16_72 = arith.constant 16 : index
    %c112_73 = arith.constant 112 : index
    %126 = vector.load %arg6[%c16_72, %c112_73] : memref<128x128xf32, #tpu.memory_space<vmem>>, vector<4x16xf32>
    tpu.vector_store %arg6[%c16_72, %c112_73], %125 {strides = array<i32>} : memref<128x128xf32, #tpu.memory_space<vmem>>, vector<4x16xf32>,
    %127 = vector.extract_strided_slice %4 {offsets = [0, 1, 2], sizes = [4, 1, 16], strides = [1, 1, 1]} : vector<4x10x18xf32> to vector<4x1x16xf32>
    %128 = vector.shape_cast %127 : vector<4x1x16xf32> to vector<4x16xf32>
    %c20 = arith.constant 20 : index
    %c0_74 = arith.constant 0 : index
    %129 = vector.load %arg6[%c20, %c0_74] : memref<128x128xf32, #tpu.memory_space<vmem>>, vector<4x16xf32>
    tpu.vector_store %arg6[%c20, %c0_74], %128 {strides = array<i32>} : memref<128x128xf32, #tpu.memory_space<vmem>>, vector<4x16xf32>,
    %130 = vector.extract_strided_slice %4 {offsets = [0, 2, 2], sizes = [4, 1, 16], strides = [1, 1, 1]} : vector<4x10x18xf32> to vector<4x1x16xf32>
    %131 = vector.shape_cast %130 : vector<4x1x16xf32> to vector<4x16xf32>
    %c20_75 = arith.constant 20 : index
    %c16_76 = arith.constant 16 : index
    %132 = vector.load %arg6[%c20_75, %c16_76] : memref<128x128xf32, #tpu.memory_space<vmem>>, vector<4x16xf32>
    tpu.vector_store %arg6[%c20_75, %c16_76], %131 {strides = array<i32>} : memref<128x128xf32, #tpu.memory_space<vmem>>, vector<4x16xf32>,
    %133 = vector.extract_strided_slice %4 {offsets = [0, 3, 2], sizes = [4, 1, 16], strides = [1, 1, 1]} : vector<4x10x18xf32> to vector<4x1x16xf32>
    %134 = vector.shape_cast %133 : vector<4x1x16xf32> to vector<4x16xf32>
    %c20_77 = arith.constant 20 : index
    %c32_78 = arith.constant 32 : index
    %135 = vector.load %arg6[%c20_77, %c32_78] : memref<128x128xf32, #tpu.memory_space<vmem>>, vector<4x16xf32>
    tpu.vector_store %arg6[%c20_77, %c32_78], %134 {strides = array<i32>} : memref<128x128xf32, #tpu.memory_space<vmem>>, vector<4x16xf32>,
    %136 = vector.extract_strided_slice %4 {offsets = [0, 4, 2], sizes = [4, 1, 16], strides = [1, 1, 1]} : vector<4x10x18xf32> to vector<4x1x16xf32>
    %137 = vector.shape_cast %136 : vector<4x1x16xf32> to vector<4x16xf32>
    %c20_79 = arith.constant 20 : index
    %c48_80 = arith.constant 48 : index
    %138 = vector.load %arg6[%c20_79, %c48_80] : memref<128x128xf32, #tpu.memory_space<vmem>>, vector<4x16xf32>
    tpu.vector_store %arg6[%c20_79, %c48_80], %137 {strides = array<i32>} : memref<128x128xf32, #tpu.memory_space<vmem>>, vector<4x16xf32>,
    %139 = vector.extract_strided_slice %4 {offsets = [0, 5, 2], sizes = [4, 1, 16], strides = [1, 1, 1]} : vector<4x10x18xf32> to vector<4x1x16xf32>
    %140 = vector.shape_cast %139 : vector<4x1x16xf32> to vector<4x16xf32>
    %c20_81 = arith.constant 20 : index
    %c64_82 = arith.constant 64 : index
    %141 = vector.load %arg6[%c20_81, %c64_82] : memref<128x128xf32, #tpu.memory_space<vmem>>, vector<4x16xf32>
    tpu.vector_store %arg6[%c20_81, %c64_82], %140 {strides = array<i32>} : memref<128x128xf32, #tpu.memory_space<vmem>>, vector<4x16xf32>,
    %142 = vector.extract_strided_slice %4 {offsets = [0, 6, 2], sizes = [4, 1, 16], strides = [1, 1, 1]} : vector<4x10x18xf32> to vector<4x1x16xf32>
    %143 = vector.shape_cast %142 : vector<4x1x16xf32> to vector<4x16xf32>
    %c20_83 = arith.constant 20 : index
    %c80_84 = arith.constant 80 : index
    %144 = vector.load %arg6[%c20_83, %c80_84] : memref<128x128xf32, #tpu.memory_space<vmem>>, vector<4x16xf32>
    tpu.vector_store %arg6[%c20_83, %c80_84], %143 {strides = array<i32>} : memref<128x128xf32, #tpu.memory_space<vmem>>, vector<4x16xf32>,
    %145 = vector.extract_strided_slice %4 {offsets = [0, 7, 2], sizes = [4, 1, 16], strides = [1, 1, 1]} : vector<4x10x18xf32> to vector<4x1x16xf32>
    %146 = vector.shape_cast %145 : vector<4x1x16xf32> to vector<4x16xf32>
    %c20_85 = arith.constant 20 : index
    %c96_86 = arith.constant 96 : index
    %147 = vector.load %arg6[%c20_85, %c96_86] : memref<128x128xf32, #tpu.memory_space<vmem>>, vector<4x16xf32>
    tpu.vector_store %arg6[%c20_85, %c96_86], %146 {strides = array<i32>} : memref<128x128xf32, #tpu.memory_space<vmem>>, vector<4x16xf32>,
    %148 = vector.extract_strided_slice %4 {offsets = [0, 8, 2], sizes = [4, 1, 16], strides = [1, 1, 1]} : vector<4x10x18xf32> to vector<4x1x16xf32>
    %149 = vector.shape_cast %148 : vector<4x1x16xf32> to vector<4x16xf32>
    %c20_87 = arith.constant 20 : index
    %c112_88 = arith.constant 112 : index
    %150 = vector.load %arg6[%c20_87, %c112_88] : memref<128x128xf32, #tpu.memory_space<vmem>>, vector<4x16xf32>
    tpu.vector_store %arg6[%c20_87, %c112_88], %149 {strides = array<i32>} : memref<128x128xf32, #tpu.memory_space<vmem>>, vector<4x16xf32>,
    %151 = vector.extract_strided_slice %4 {offsets = [0, 2, 0], sizes = [4, 1, 16], strides = [1, 1, 1]} : vector<4x10x18xf32> to vector<4x1x16xf32>
    %152 = vector.shape_cast %151 : vector<4x1x16xf32> to vector<4x16xf32>
    %c24 = arith.constant 24 : index
    %c0_89 = arith.constant 0 : index
    %153 = vector.load %arg6[%c24, %c0_89] : memref<128x128xf32, #tpu.memory_space<vmem>>, vector<4x16xf32>
    tpu.vector_store %arg6[%c24, %c0_89], %152 {strides = array<i32>} : memref<128x128xf32, #tpu.memory_space<vmem>>, vector<4x16xf32>,
    %154 = vector.extract_strided_slice %4 {offsets = [0, 3, 0], sizes = [4, 1, 16], strides = [1, 1, 1]} : vector<4x10x18xf32> to vector<4x1x16xf32>
    %155 = vector.shape_cast %154 : vector<4x1x16xf32> to vector<4x16xf32>
    %c24_90 = arith.constant 24 : index
    %c16_91 = arith.constant 16 : index
    %156 = vector.load %arg6[%c24_90, %c16_91] : memref<128x128xf32, #tpu.memory_space<vmem>>, vector<4x16xf32>
    tpu.vector_store %arg6[%c24_90, %c16_91], %155 {strides = array<i32>} : memref<128x128xf32, #tpu.memory_space<vmem>>, vector<4x16xf32>,
    %157 = vector.extract_strided_slice %4 {offsets = [0, 4, 0], sizes = [4, 1, 16], strides = [1, 1, 1]} : vector<4x10x18xf32> to vector<4x1x16xf32>
    %158 = vector.shape_cast %157 : vector<4x1x16xf32> to vector<4x16xf32>
    %c24_92 = arith.constant 24 : index
    %c32_93 = arith.constant 32 : index
    %159 = vector.load %arg6[%c24_92, %c32_93] : memref<128x128xf32, #tpu.memory_space<vmem>>, vector<4x16xf32>
    tpu.vector_store %arg6[%c24_92, %c32_93], %158 {strides = array<i32>} : memref<128x128xf32, #tpu.memory_space<vmem>>, vector<4x16xf32>,
    %160 = vector.extract_strided_slice %4 {offsets = [0, 5, 0], sizes = [4, 1, 16], strides = [1, 1, 1]} : vector<4x10x18xf32> to vector<4x1x16xf32>
    %161 = vector.shape_cast %160 : vector<4x1x16xf32> to vector<4x16xf32>
    %c24_94 = arith.constant 24 : index
    %c48_95 = arith.constant 48 : index
    %162 = vector.load %arg6[%c24_94, %c48_95] : memref<128x128xf32, #tpu.memory_space<vmem>>, vector<4x16xf32>
    tpu.vector_store %arg6[%c24_94, %c48_95], %161 {strides = array<i32>} : memref<128x128xf32, #tpu.memory_space<vmem>>, vector<4x16xf32>,
    %163 = vector.extract_strided_slice %4 {offsets = [0, 6, 0], sizes = [4, 1, 16], strides = [1, 1, 1]} : vector<4x10x18xf32> to vector<4x1x16xf32>
    %164 = vector.shape_cast %163 : vector<4x1x16xf32> to vector<4x16xf32>
    %c24_96 = arith.constant 24 : index
    %c64_97 = arith.constant 64 : index
    %165 = vector.load %arg6[%c24_96, %c64_97] : memref<128x128xf32, #tpu.memory_space<vmem>>, vector<4x16xf32>
    tpu.vector_store %arg6[%c24_96, %c64_97], %164 {strides = array<i32>} : memref<128x128xf32, #tpu.memory_space<vmem>>, vector<4x16xf32>,
    %166 = vector.extract_strided_slice %4 {offsets = [0, 7, 0], sizes = [4, 1, 16], strides = [1, 1, 1]} : vector<4x10x18xf32> to vector<4x1x16xf32>
    %167 = vector.shape_cast %166 : vector<4x1x16xf32> to vector<4x16xf32>
    %c24_98 = arith.constant 24 : index
    %c80_99 = arith.constant 80 : index
    %168 = vector.load %arg6[%c24_98, %c80_99] : memref<128x128xf32, #tpu.memory_space<vmem>>, vector<4x16xf32>
    tpu.vector_store %arg6[%c24_98, %c80_99], %167 {strides = array<i32>} : memref<128x128xf32, #tpu.memory_space<vmem>>, vector<4x16xf32>,
    %169 = vector.extract_strided_slice %4 {offsets = [0, 8, 0], sizes = [4, 1, 16], strides = [1, 1, 1]} : vector<4x10x18xf32> to vector<4x1x16xf32>
    %170 = vector.shape_cast %169 : vector<4x1x16xf32> to vector<4x16xf32>
    %c24_100 = arith.constant 24 : index
    %c96_101 = arith.constant 96 : index
    %171 = vector.load %arg6[%c24_100, %c96_101] : memref<128x128xf32, #tpu.memory_space<vmem>>, vector<4x16xf32>
    tpu.vector_store %arg6[%c24_100, %c96_101], %170 {strides = array<i32>} : memref<128x128xf32, #tpu.memory_space<vmem>>, vector<4x16xf32>,
    %172 = vector.extract_strided_slice %4 {offsets = [0, 9, 0], sizes = [4, 1, 16], strides = [1, 1, 1]} : vector<4x10x18xf32> to vector<4x1x16xf32>
    %173 = vector.shape_cast %172 : vector<4x1x16xf32> to vector<4x16xf32>
    %c24_102 = arith.constant 24 : index
    %c112_103 = arith.constant 112 : index
    %174 = vector.load %arg6[%c24_102, %c112_103] : memref<128x128xf32, #tpu.memory_space<vmem>>, vector<4x16xf32>
    tpu.vector_store %arg6[%c24_102, %c112_103], %173 {strides = array<i32>} : memref<128x128xf32, #tpu.memory_space<vmem>>, vector<4x16xf32>,
    %175 = vector.extract_strided_slice %4 {offsets = [0, 2, 1], sizes = [4, 1, 16], strides = [1, 1, 1]} : vector<4x10x18xf32> to vector<4x1x16xf32>
    %176 = vector.shape_cast %175 : vector<4x1x16xf32> to vector<4x16xf32>
    %c28 = arith.constant 28 : index
    %c0_104 = arith.constant 0 : index
    %177 = vector.load %arg6[%c28, %c0_104] : memref<128x128xf32, #tpu.memory_space<vmem>>, vector<4x16xf32>
    tpu.vector_store %arg6[%c28, %c0_104], %176 {strides = array<i32>} : memref<128x128xf32, #tpu.memory_space<vmem>>, vector<4x16xf32>,
    %178 = vector.extract_strided_slice %4 {offsets = [0, 3, 1], sizes = [4, 1, 16], strides = [1, 1, 1]} : vector<4x10x18xf32> to vector<4x1x16xf32>
    %179 = vector.shape_cast %178 : vector<4x1x16xf32> to vector<4x16xf32>
    %c28_105 = arith.constant 28 : index
    %c16_106 = arith.constant 16 : index
    %180 = vector.load %arg6[%c28_105, %c16_106] : memref<128x128xf32, #tpu.memory_space<vmem>>, vector<4x16xf32>
    tpu.vector_store %arg6[%c28_105, %c16_106], %179 {strides = array<i32>} : memref<128x128xf32, #tpu.memory_space<vmem>>, vector<4x16xf32>,
    %181 = vector.extract_strided_slice %4 {offsets = [0, 4, 1], sizes = [4, 1, 16], strides = [1, 1, 1]} : vector<4x10x18xf32> to vector<4x1x16xf32>
    %182 = vector.shape_cast %181 : vector<4x1x16xf32> to vector<4x16xf32>
    %c28_107 = arith.constant 28 : index
    %c32_108 = arith.constant 32 : index
    %183 = vector.load %arg6[%c28_107, %c32_108] : memref<128x128xf32, #tpu.memory_space<vmem>>, vector<4x16xf32>
    tpu.vector_store %arg6[%c28_107, %c32_108], %182 {strides = array<i32>} : memref<128x128xf32, #tpu.memory_space<vmem>>, vector<4x16xf32>,
    %184 = vector.extract_strided_slice %4 {offsets = [0, 5, 1], sizes = [4, 1, 16], strides = [1, 1, 1]} : vector<4x10x18xf32> to vector<4x1x16xf32>
    %185 = vector.shape_cast %184 : vector<4x1x16xf32> to vector<4x16xf32>
    %c28_109 = arith.constant 28 : index
    %c48_110 = arith.constant 48 : index
    %186 = vector.load %arg6[%c28_109, %c48_110] : memref<128x128xf32, #tpu.memory_space<vmem>>, vector<4x16xf32>
    tpu.vector_store %arg6[%c28_109, %c48_110], %185 {strides = array<i32>} : memref<128x128xf32, #tpu.memory_space<vmem>>, vector<4x16xf32>,
    %187 = vector.extract_strided_slice %4 {offsets = [0, 6, 1], sizes = [4, 1, 16], strides = [1, 1, 1]} : vector<4x10x18xf32> to vector<4x1x16xf32>
    %188 = vector.shape_cast %187 : vector<4x1x16xf32> to vector<4x16xf32>
    %c28_111 = arith.constant 28 : index
    %c64_112 = arith.constant 64 : index
    %189 = vector.load %arg6[%c28_111, %c64_112] : memref<128x128xf32, #tpu.memory_space<vmem>>, vector<4x16xf32>
    tpu.vector_store %arg6[%c28_111, %c64_112], %188 {strides = array<i32>} : memref<128x128xf32, #tpu.memory_space<vmem>>, vector<4x16xf32>,
    %190 = vector.extract_strided_slice %4 {offsets = [0, 7, 1], sizes = [4, 1, 16], strides = [1, 1, 1]} : vector<4x10x18xf32> to vector<4x1x16xf32>
    %191 = vector.shape_cast %190 : vector<4x1x16xf32> to vector<4x16xf32>
    %c28_113 = arith.constant 28 : index
    %c80_114 = arith.constant 80 : index
    %192 = vector.load %arg6[%c28_113, %c80_114] : memref<128x128xf32, #tpu.memory_space<vmem>>, vector<4x16xf32>
    tpu.vector_store %arg6[%c28_113, %c80_114], %191 {strides = array<i32>} : memref<128x128xf32, #tpu.memory_space<vmem>>, vector<4x16xf32>,
    %193 = vector.extract_strided_slice %4 {offsets = [0, 8, 1], sizes = [4, 1, 16], strides = [1, 1, 1]} : vector<4x10x18xf32> to vector<4x1x16xf32>
    %194 = vector.shape_cast %193 : vector<4x1x16xf32> to vector<4x16xf32>
    %c28_115 = arith.constant 28 : index
    %c96_116 = arith.constant 96 : index
    %195 = vector.load %arg6[%c28_115, %c96_116] : memref<128x128xf32, #tpu.memory_space<vmem>>, vector<4x16xf32>
    tpu.vector_store %arg6[%c28_115, %c96_116], %194 {strides = array<i32>} : memref<128x128xf32, #tpu.memory_space<vmem>>, vector<4x16xf32>,
    %196 = vector.extract_strided_slice %4 {offsets = [0, 9, 1], sizes = [4, 1, 16], strides = [1, 1, 1]} : vector<4x10x18xf32> to vector<4x1x16xf32>
    %197 = vector.shape_cast %196 : vector<4x1x16xf32> to vector<4x16xf32>
    %c28_117 = arith.constant 28 : index
    %c112_118 = arith.constant 112 : index
    %198 = vector.load %arg6[%c28_117, %c112_118] : memref<128x128xf32, #tpu.memory_space<vmem>>, vector<4x16xf32>
    tpu.vector_store %arg6[%c28_117, %c112_118], %197 {strides = array<i32>} : memref<128x128xf32, #tpu.memory_space<vmem>>, vector<4x16xf32>,
    %199 = vector.extract_strided_slice %4 {offsets = [0, 2, 2], sizes = [4, 1, 16], strides = [1, 1, 1]} : vector<4x10x18xf32> to vector<4x1x16xf32>
    %200 = vector.shape_cast %199 : vector<4x1x16xf32> to vector<4x16xf32>
    %c32_119 = arith.constant 32 : index
    %c0_120 = arith.constant 0 : index
    %201 = vector.load %arg6[%c32_119, %c0_120] : memref<128x128xf32, #tpu.memory_space<vmem>>, vector<4x16xf32>
    tpu.vector_store %arg6[%c32_119, %c0_120], %200 {strides = array<i32>} : memref<128x128xf32, #tpu.memory_space<vmem>>, vector<4x16xf32>,
    %202 = vector.extract_strided_slice %4 {offsets = [0, 3, 2], sizes = [4, 1, 16], strides = [1, 1, 1]} : vector<4x10x18xf32> to vector<4x1x16xf32>
    %203 = vector.shape_cast %202 : vector<4x1x16xf32> to vector<4x16xf32>
    %c32_121 = arith.constant 32 : index
    %c16_122 = arith.constant 16 : index
    %204 = vector.load %arg6[%c32_121, %c16_122] : memref<128x128xf32, #tpu.memory_space<vmem>>, vector<4x16xf32>
    tpu.vector_store %arg6[%c32_121, %c16_122], %203 {strides = array<i32>} : memref<128x128xf32, #tpu.memory_space<vmem>>, vector<4x16xf32>,
    %205 = vector.extract_strided_slice %4 {offsets = [0, 4, 2], sizes = [4, 1, 16], strides = [1, 1, 1]} : vector<4x10x18xf32> to vector<4x1x16xf32>
    %206 = vector.shape_cast %205 : vector<4x1x16xf32> to vector<4x16xf32>
    %c32_123 = arith.constant 32 : index
    %c32_124 = arith.constant 32 : index
    %207 = vector.load %arg6[%c32_123, %c32_124] : memref<128x128xf32, #tpu.memory_space<vmem>>, vector<4x16xf32>
    tpu.vector_store %arg6[%c32_123, %c32_124], %206 {strides = array<i32>} : memref<128x128xf32, #tpu.memory_space<vmem>>, vector<4x16xf32>,
    %208 = vector.extract_strided_slice %4 {offsets = [0, 5, 2], sizes = [4, 1, 16], strides = [1, 1, 1]} : vector<4x10x18xf32> to vector<4x1x16xf32>
    %209 = vector.shape_cast %208 : vector<4x1x16xf32> to vector<4x16xf32>
    %c32_125 = arith.constant 32 : index
    %c48_126 = arith.constant 48 : index
    %210 = vector.load %arg6[%c32_125, %c48_126] : memref<128x128xf32, #tpu.memory_space<vmem>>, vector<4x16xf32>
    tpu.vector_store %arg6[%c32_125, %c48_126], %209 {strides = array<i32>} : memref<128x128xf32, #tpu.memory_space<vmem>>, vector<4x16xf32>,
    %211 = vector.extract_strided_slice %4 {offsets = [0, 6, 2], sizes = [4, 1, 16], strides = [1, 1, 1]} : vector<4x10x18xf32> to vector<4x1x16xf32>
    %212 = vector.shape_cast %211 : vector<4x1x16xf32> to vector<4x16xf32>
    %c32_127 = arith.constant 32 : index
    %c64_128 = arith.constant 64 : index
    %213 = vector.load %arg6[%c32_127, %c64_128] : memref<128x128xf32, #tpu.memory_space<vmem>>, vector<4x16xf32>
    tpu.vector_store %arg6[%c32_127, %c64_128], %212 {strides = array<i32>} : memref<128x128xf32, #tpu.memory_space<vmem>>, vector<4x16xf32>,
    %214 = vector.extract_strided_slice %4 {offsets = [0, 7, 2], sizes = [4, 1, 16], strides = [1, 1, 1]} : vector<4x10x18xf32> to vector<4x1x16xf32>
    %215 = vector.shape_cast %214 : vector<4x1x16xf32> to vector<4x16xf32>
    %c32_129 = arith.constant 32 : index
    %c80_130 = arith.constant 80 : index
    %216 = vector.load %arg6[%c32_129, %c80_130] : memref<128x128xf32, #tpu.memory_space<vmem>>, vector<4x16xf32>
    tpu.vector_store %arg6[%c32_129, %c80_130], %215 {strides = array<i32>} : memref<128x128xf32, #tpu.memory_space<vmem>>, vector<4x16xf32>,
    %217 = vector.extract_strided_slice %4 {offsets = [0, 8, 2], sizes = [4, 1, 16], strides = [1, 1, 1]} : vector<4x10x18xf32> to vector<4x1x16xf32>
    %218 = vector.shape_cast %217 : vector<4x1x16xf32> to vector<4x16xf32>
    %c32_131 = arith.constant 32 : index
    %c96_132 = arith.constant 96 : index
    %219 = vector.load %arg6[%c32_131, %c96_132] : memref<128x128xf32, #tpu.memory_space<vmem>>, vector<4x16xf32>
    tpu.vector_store %arg6[%c32_131, %c96_132], %218 {strides = array<i32>} : memref<128x128xf32, #tpu.memory_space<vmem>>, vector<4x16xf32>,
    %220 = vector.extract_strided_slice %4 {offsets = [0, 9, 2], sizes = [4, 1, 16], strides = [1, 1, 1]} : vector<4x10x18xf32> to vector<4x1x16xf32>
    %221 = vector.shape_cast %220 : vector<4x1x16xf32> to vector<4x16xf32>
    %c32_133 = arith.constant 32 : index
    %c112_134 = arith.constant 112 : index
    %222 = vector.load %arg6[%c32_133, %c112_134] : memref<128x128xf32, #tpu.memory_space<vmem>>, vector<4x16xf32>
    tpu.vector_store %arg6[%c32_133, %c112_134], %221 {strides = array<i32>} : memref<128x128xf32, #tpu.memory_space<vmem>>, vector<4x16xf32>,
    %c0_135 = arith.constant 0 : index
    %c0_136 = arith.constant 0 : index
    %223 = vector.load %arg3[%c0_135, %c0_136] : memref<8x128xf32, #tpu.memory_space<vmem>>, vector<8x128xf32>
    %c0_137 = arith.constant 0 : index
    %c0_138 = arith.constant 0 : index
    %224 = vector.load %arg6[%c0_137, %c0_138] : memref<128x128xf32, #tpu.memory_space<vmem>>, vector<128x128xf32>
    %cst_139 = arith.constant dense<0.000000e+00> : vector<8x128xf32>
    %225 = tpu.matmul %223, %224, %cst_139 {dimension_numbers = #tpu.dot_dimension_numbers<[1], [0], [0], [1], [0, 0, 1, 1], [], []>} : vector<8x128xf32>, vector<128x128xf32>, vector<8x128xf32> -> vector<8x128xf32>
    %c0_140 = arith.constant 0 : index
    %c0_141 = arith.constant 0 : index
    %c0_142 = arith.constant 0 : index
    %226 = vector.load %arg4[%c0_140, %c0_141, %c0_142] : memref<1x8x128xf32, #tpu.memory_space<vmem>>, vector<1x8x128xf32>
    %227 = vector.shape_cast %226 : vector<1x8x128xf32> to vector<8x128xf32>
    %228 = vector.shape_cast %225 : vector<8x128xf32> to vector<1x8x128xf32>
    tpu.vector_store %arg4[%c0_140, %c0_141, %c0_142], %228 {strides = array<i32>} : memref<1x8x128xf32, #tpu.memory_space<vmem>>, vector<1x8x128xf32>,
    %cst_143 = arith.constant dense<0.000000e+00> : vector<8xf32>
    %229 = vector.multi_reduction <add>, %225, %cst_143 [1] : vector<8x128xf32> to vector<8xf32>
    %230 = vector.shape_cast %229 : vector<8xf32> to vector<8x1xf32>
    %cst_144 = arith.constant 7.812500e-03 : f32
    %231 = vector.broadcast %cst_144 : f32 to vector<8x1xf32>
    %232 = arith.mulf %230, %231 : vector<8x1xf32>
    %233 = vector.broadcast %232 : vector<8x1xf32> to vector<8x128xf32>
    %234 = arith.subf %225, %233 : vector<8x128xf32>
    %235 = arith.mulf %234, %234 : vector<8x128xf32>
    %cst_145 = arith.constant dense<0.000000e+00> : vector<8xf32>
    %236 = vector.multi_reduction <add>, %235, %cst_145 [1] : vector<8x128xf32> to vector<8xf32>
    %237 = vector.shape_cast %236 : vector<8xf32> to vector<8x1xf32>
    %c0_146 = arith.constant 0 : index
    %c0_147 = arith.constant 0 : index
    %c0_148 = arith.constant 0 : index
    %c0_149 = arith.constant 0 : index
    %238 = vector.load %arg5[%c0_146, %c0_147, %c0_148, %c0_149] : memref<1x1x8x2xf32, #tpu.memory_space<vmem>>, vector<1x1x8x1xf32>
    %239 = vector.shape_cast %238 : vector<1x1x8x1xf32> to vector<8x1xf32>
    %240 = vector.shape_cast %230 : vector<8x1xf32> to vector<1x1x8x1xf32>
    tpu.vector_store %arg5[%c0_146, %c0_147, %c0_148, %c0_149], %240 {strides = array<i32>} : memref<1x1x8x2xf32, #tpu.memory_space<vmem>>, vector<1x1x8x1xf32>,
    %c0_150 = arith.constant 0 : index
    %c0_151 = arith.constant 0 : index
    %c0_152 = arith.constant 0 : index
    %c1 = arith.constant 1 : index
    %241 = vector.load %arg5[%c0_150, %c0_151, %c0_152, %c1] : memref<1x1x8x2xf32, #tpu.memory_space<vmem>>, vector<1x1x8x1xf32>
    %242 = vector.shape_cast %241 : vector<1x1x8x1xf32> to vector<8x1xf32>
    %243 = vector.shape_cast %237 : vector<8x1xf32> to vector<1x1x8x1xf32>
    tpu.vector_store %arg5[%c0_150, %c0_151, %c0_152, %c1], %243 {strides = array<i32>} : memref<1x1x8x2xf32, #tpu.memory_space<vmem>>, vector<1x1x8x1xf32>,
    return
  }
  func.func @transform_0(%arg0: i32, %arg1: i32) -> (i32, i32, i32, i32) {
    %c0_i32 = arith.constant 0 : i32
    %c0_i32_0 = arith.constant 0 : i32
    %c0_i32_1 = arith.constant 0 : i32
    %c0_i32_2 = arith.constant 0 : i32
    return %arg0, %c0_i32, %c0_i32_0, %c0_i32_1 : i32, i32, i32, i32
  }
  func.func @transform_1(%arg0: i32, %arg1: i32) -> (i32, i32) {
    %c0_i32 = arith.constant 0 : i32
    %c0_i32_0 = arith.constant 0 : i32
    %c0_i32_1 = arith.constant 0 : i32
    return %c0_i32, %c0_i32_0 : i32, i32
  }
  func.func @transform_2(%arg0: i32, %arg1: i32) -> (i32, i32, i32) {
    %c0_i32 = arith.constant 0 : i32
    %c0_i32_0 = arith.constant 0 : i32
    return %arg0, %c0_i32, %arg1 : i32, i32, i32
  }
  func.func @transform_3(%arg0: i32, %arg1: i32) -> (i32, i32, i32, i32) {
    %c0_i32 = arith.constant 0 : i32
    %c0_i32_0 = arith.constant 0 : i32
    %c0_i32_1 = arith.constant 0 : i32
    return %arg0, %arg1, %c0_i32, %c0_i32_0 : i32, i32, i32, i32
  }
}

module attributes {stable_mosaic.version = 11 : i64} {
  func.func @_bn_relu_kernel(%arg0: i32, %arg1: i32, %arg2: memref<1x8x128xf32, #tpu.memory_space<vmem>>, %arg3: memref<8x2xf32, #tpu.memory_space<vmem>>, %arg4: memref<1x8x128xf32, #tpu.memory_space<vmem>>) attributes {dimension_semantics = [#tpu.dimension_semantics<parallel>, #tpu.dimension_semantics<parallel>], iteration_bounds = array<i64: 2, 2>, scalar_prefetch = 0 : i64, scratch_operands = 0 : i64, tpu.core_type = #tpu.core_type<tc>, window_params = [{transform_indices = @transform_0, window_bounds = array<i64: 1, 8, 128>}, {pipeline_mode = #tpu.pipeline_mode<synchronous>, transform_indices = @transform_1, window_bounds = array<i64: 8, 2>}, {transform_indices = @transform_2, window_bounds = array<i64: 1, 8, 128>}]} {
    %c0 = arith.constant 0 : index
    %c0_0 = arith.constant 0 : index
    %0 = vector.load %arg3[%c0, %c0_0] : memref<8x2xf32, #tpu.memory_space<vmem>>, vector<8x1xf32>
    %c0_1 = arith.constant 0 : index
    %c1 = arith.constant 1 : index
    %1 = vector.load %arg3[%c0_1, %c1] : memref<8x2xf32, #tpu.memory_space<vmem>>, vector<8x1xf32>
    %c0_2 = arith.constant 0 : index
    %c0_3 = arith.constant 0 : index
    %c0_4 = arith.constant 0 : index
    %2 = vector.load %arg2[%c0_2, %c0_3, %c0_4] : memref<1x8x128xf32, #tpu.memory_space<vmem>>, vector<1x8x128xf32>
    %3 = vector.shape_cast %0 : vector<8x1xf32> to vector<1x8x1xf32>
    %4 = vector.broadcast %3 : vector<1x8x1xf32> to vector<1x8x128xf32>
    %5 = arith.mulf %2, %4 : vector<1x8x128xf32>
    %6 = vector.shape_cast %1 : vector<8x1xf32> to vector<1x8x1xf32>
    %7 = vector.broadcast %6 : vector<1x8x1xf32> to vector<1x8x128xf32>
    %8 = arith.addf %5, %7 : vector<1x8x128xf32>
    %cst = arith.constant 0.000000e+00 : f32
    %9 = vector.broadcast %cst : f32 to vector<1x8x128xf32>
    %10 = arith.maximumf %8, %9 : vector<1x8x128xf32>
    %c0_5 = arith.constant 0 : index
    %c0_6 = arith.constant 0 : index
    %c0_7 = arith.constant 0 : index
    %11 = vector.load %arg4[%c0_5, %c0_6, %c0_7] : memref<1x8x128xf32, #tpu.memory_space<vmem>>, vector<1x8x128xf32>
    tpu.vector_store %arg4[%c0_5, %c0_6, %c0_7], %10 {strides = array<i32>} : memref<1x8x128xf32, #tpu.memory_space<vmem>>, vector<1x8x128xf32>,
    return
  }
  func.func @transform_0(%arg0: i32, %arg1: i32) -> (i32, i32, i32) {
    %c0_i32 = arith.constant 0 : i32
    %c0_i32_0 = arith.constant 0 : i32
    return %arg0, %c0_i32, %arg1 : i32, i32, i32
  }
  func.func @transform_1(%arg0: i32, %arg1: i32) -> (i32, i32) {
    %c0_i32 = arith.constant 0 : i32
    %c0_i32_0 = arith.constant 0 : i32
    %c0_i32_1 = arith.constant 0 : i32
    return %c0_i32, %c0_i32_0 : i32, i32
  }
  func.func @transform_2(%arg0: i32, %arg1: i32) -> (i32, i32, i32) {
    %c0_i32 = arith.constant 0 : i32
    %c0_i32_0 = arith.constant 0 : i32
    return %arg0, %c0_i32, %arg1 : i32, i32, i32
  }
}

</mosaic_0001>

<llo_original>
// kernel: conv_block_forward.3
$region0: #{conv_block_forward.3}
  #allocation0 [shape = 'u32[]', space=smem, size = 0x4, offset = 0x4, fixed_abs, tag = 'smem constant byte address 0x4 - core index']
  #allocation1 [shape = 'u32[144,128]{1,0:T(1,128)}', space=vmem, size = 0x12000, scoped, tag = 'internal scratch']
  %s0 = inlined_call_operand.vmem [shape: f32[2,8,256], index: 0, kind: input, shape index: {}]
  %s1 = inlined_call_operand.vmem [shape: f32[8,2], index: 1, kind: input, shape index: {}]
  %s2 = inlined_call_operand.vmem [shape: f32[2,8,256], index: 2, kind: output, shape index: {}]
  %s3 = sld [smem:[#allocation0]]
  $region41: #{conv_block_forward.3} parent=0
    _
  %s5 = ssub.s32 1, %s3
  %s6 = scalar_select 0, %s5, %s3
  loop: start=0, step=1, limit=6
  $region2: #{conv_block_forward.3} parent=0 // loop_pre_header
    _
  $region3: #{conv_block_forward.3} parent=0 // loop_header
    %s8 = sphi 0, %s12
    %p9 = scmp.ge.s32.totalorder %s8, 6
    %s15 = sphi 0, %s27
    %s16 = sphi 0, %s23
    %s17 = sphi 0, %s15
    %s18 = sphi 0, %s16
    %s19 = sphi 0, %s17
    %s20 = sphi 0, %s18
    %s32 = sphi 0, %s34
    %s35 = sphi 0, %s32
    %s36 = sphi 0, %s35
    %s52 = sphi 0, %s36
    %s56 = sphi 0, %s56
    %s58 = sphi 0, %s56
    %s59 = sphi 0, %s58
    %s73 = sphi 0, %s59
    %s81 = sphi 0, %s83
    %s84 = sphi 0, %s81
    %s85 = sphi 0, %s84
    %s101 = sphi 0, %s85
  $region4: #{conv_block_forward.3} parent=0 // loop_header_branch
    %11 = sbr.rel (%p9) target = $region8
  $region5: #{conv_block_forward.3} parent=0 // loop_body
    %s13 = ssub.s32 %s8, 1
    %s14 = ssub.s32 %s8, 2
    %s21 = sadd.s32 1, %s16
    %p22 = scmp.ge.s32.totalorder %s21, 2
    %s23 = scalar_select %p22, 0, %s21
    %s24 = sadd.s32 1, %s15
    %s25 = scalar_select %p22, %s24, %s15
    %p26 = scmp.ge.s32.totalorder %s25, 2
    %s27 = scalar_select %p26, 0, %s25
    %s28 = ssub.s32 %s15, %s27
    %s29 = ssub.s32 %s16, %s23
    %s30 = sor.u32 %s28, %s29
    %p31 = scmp.eq.s32.totalorder %s30, 0
    %s33 = sadd.s32 %s32, 1
    %s34 = scalar_select %p31, %s32, %s33
    %p37 = pneg %p31
    %p38 = scmp.eq.s32.totalorder %s8, 3
    %p39 = por %p37, %p38
    %p40 = scmp.ne.s32.totalorder %s32, %s35
    %p41 = scmp.eq.s32.totalorder %s8, 0
    %p42 = por %p40, %p41
    %p43 = scmp.ne.s32.totalorder %s32, %s35
    %p44 = scmp.eq.s32.totalorder %s13, 3
    %p45 = por %p43, %p44
    %p46 = scmp.ne.s32.totalorder %s35, %s36
    %p47 = scmp.eq.s32.totalorder %s13, 0
    %p48 = por %p46, %p47
    %p49 = scmp.ne.s32.totalorder %s35, %s36
    %p50 = scmp.eq.s32.totalorder %s14, 3
    %p51 = por %p49, %p50
    %p53 = scmp.ne.s32.totalorder %s36, %s52
    %p54 = scmp.eq.s32.totalorder %s14, 0
    %p55 = por %p53, %p54
    %s57 = sadd.s32 %s56, 1
    %p60 = scmp.eq.s32.totalorder %s8, 3
    %p61 = scmp.ne.s32.totalorder %s56, %s58
    %p62 = scmp.eq.s32.totalorder %s8, 0
    %p63 = por %p61, %p62
    %p64 = scmp.ne.s32.totalorder %s56, %s58
    %p65 = scmp.eq.s32.totalorder %s13, 3
    %p66 = por %p64, %p65
    %p67 = scmp.ne.s32.totalorder %s58, %s59
    %p68 = scmp.eq.s32.totalorder %s13, 0
    %p69 = por %p67, %p68
    %p70 = scmp.ne.s32.totalorder %s58, %s59
    %p71 = scmp.eq.s32.totalorder %s14, 3
    %p72 = por %p70, %p71
    %p74 = scmp.ne.s32.totalorder %s59, %s73
    %p75 = scmp.eq.s32.totalorder %s14, 0
    %p76 = por %p74, %p75
    %s77 = ssub.s32 %s15, %s27
    %s78 = ssub.s32 %s16, %s23
    %s79 = sor.u32 %s77, %s78
    %p80 = scmp.eq.s32.totalorder %s79, 0
    %s82 = sadd.s32 %s81, 1
    %s83 = scalar_select %p80, %s81, %s82
    %p86 = pneg %p80
    %p87 = scmp.eq.s32.totalorder %s8, 3
    %p88 = por %p86, %p87
    %p89 = scmp.ne.s32.totalorder %s81, %s84
    %p90 = scmp.eq.s32.totalorder %s8, 0
    %p91 = por %p89, %p90
    %p92 = scmp.ne.s32.totalorder %s81, %s84
    %p93 = scmp.eq.s32.totalorder %s13, 3
    %p94 = por %p92, %p93
    %p95 = scmp.ne.s32.totalorder %s84, %s85
    %p96 = scmp.eq.s32.totalorder %s13, 0
    %p97 = por %p95, %p96
    %p98 = scmp.ne.s32.totalorder %s84, %s85
    %p99 = scmp.eq.s32.totalorder %s14, 3
    %p100 = por %p98, %p99
    %p102 = scmp.ne.s32.totalorder %s85, %s101
    %p103 = scmp.eq.s32.totalorder %s14, 0
    %p104 = por %p102, %p103
    %p105 = scmp.le.s32.totalorder 1, %s8
    %p106 = scmp.lt.s32.totalorder %s8, 5
    %p107 = pnand %p105, %p106
    %p108 = pneg %p107
    // Predicated region
    $region9: #{conv_block_forward.3} parent=5 // pred_check
      _
    $region10: #{conv_block_forward.3} parent=5 // pred_check_branch
      %110 = sbr.rel (%p107) target = $region12
    $region11: #{conv_block_forward.3} parent=5 // pred_region
      %s111 = ssub.s32 %s8, 1
      // Predicated region
      $region13: #{conv_block_forward.3} parent=11 // pred_check
        %p112 = pneg %p69
      $region14: #{conv_block_forward.3} parent=11 // pred_check_branch
        %114 = sbr.rel (%p112) target = $region16
      $region15: #{conv_block_forward.3} parent=11 // pred_region
        _
      $region16: #{conv_block_forward.3} parent=11 // pred_fallthru
        _
    $region12: #{conv_block_forward.3} parent=5 // pred_fallthru
      _
    %p115 = scmp.lt.s32.totalorder %s8, 4
    // Predicated region
    $region17: #{conv_block_forward.3} parent=5 // pred_check
      %p116 = pneg %p115
    $region18: #{conv_block_forward.3} parent=5 // pred_check_branch
      %118 = sbr.rel (%p116) target = $region20
    $region19: #{conv_block_forward.3} parent=5 // pred_region
      // Predicated region
      $region21: #{conv_block_forward.3} parent=19 // pred_check
        %p119 = pneg %p42
      $region22: #{conv_block_forward.3} parent=19 // pred_check_branch
        %121 = sbr.rel (%p119) target = $region24
      $region23: #{conv_block_forward.3} parent=19 // pred_region
        %p122 = scmp.lt.s32.totalorder %s15, 1
        %s123 = scalar_select %p122, %s15, 1
        %p124 = scmp.lt.s32.totalorder %s16, 1
        %s125 = scalar_select %p124, %s16, 1
        %s126 = smul.addr %s123, 2
        %s127 = sadd.s32 %s125, %s126
        %s128 = smul.addr %s127, 8
        %s129 = scalar_lea.vmem %s0, %s128
      $region24: #{conv_block_forward.3} parent=19 // pred_fallthru
        _
    $region20: #{conv_block_forward.3} parent=5 // pred_fallthru
      _
    %p130 = scmp.le.s32.totalorder 1, %s8
    %p131 = scmp.lt.s32.totalorder %s8, 5
    %p132 = pnand %p130, %p131
    %p133 = pneg %p132
    // Predicated region
    $region25: #{conv_block_forward.3} parent=5 // pred_check
      _
    $region26: #{conv_block_forward.3} parent=5 // pred_check_branch
      %135 = sbr.rel (%p132) target = $region28
    $region27: #{conv_block_forward.3} parent=5 // pred_region
      %s136 = ssub.s32 %s8, 1
      %p137 = scmp.lt.s32.totalorder %s17, 1
      %s138 = scalar_select %p137, %s17, 1
      %p139 = scmp.lt.s32.totalorder %s18, 1
      %s140 = scalar_select %p139, %s18, 1
      %s141 = smul.addr %s138, 2
      %s142 = sadd.s32 %s140, %s141
      %s143 = smul.addr %s142, 8
      %s144 = scalar_lea.vmem %s0, %s143
      %p145 = pneg %p48
      %p146 = pneg %p45
      %p147 = pneg %p69
      %p148 = pneg %p66
      %p149 = pneg %p97
      %p150 = pneg %p94
      %p151 = scmp.lt.s32.totalorder %s17, 1
      %s152 = scalar_select %p151, %s17, 1
      %p153 = scmp.lt.s32.totalorder %s18, 1
      %s154 = scalar_select %p153, %s18, 1
      %s155 = smul.addr %s152, 2
      %s156 = sadd.s32 %s154, %s155
      %s157 = smul.addr %s156, 8
      %s158 = scalar_lea.vmem %s2, %s157
      %p159 = scmp.lt.s32.totalorder %s17, 1
      %s160 = scalar_select %p159, %s17, 1
      %p161 = scmp.lt.s32.totalorder %s18, 1
      %s162 = scalar_select %p161, %s18, 1
      %s163 = smul.addr %s160, 2
      %s164 = sadd.s32 %s162, %s163
      %s165 = smul.addr %s164, 8
      %s166 = scalar_lea.vmem %s0, %s165
      %p167 = scmp.lt.s32.totalorder %s17, 1
      %s168 = scalar_select %p167, %s17, 1
      %p169 = scmp.lt.s32.totalorder %s18, 1
      %s170 = scalar_select %p169, %s18, 1
      %s171 = smul.addr %s168, 2
      %s172 = sadd.s32 %s170, %s171
      %s173 = smul.addr %s172, 8
      %s174 = scalar_lea.vmem %s2, %s173
      %v175 = vld [vmem:[%s1] sm:$0xff]
      %v176 = vld [vmem:[%s166] sm:$0xff]
      %178 = vset.pattern.permute.xlu0 0
      %179 = vperm.xlu0 %178, %v175
      %v180 = vpop.permute.xlu0 %179
      %v182 = vmul.f32 %v176, %v180
      %183 = vset.pattern.permute.xlu0 1
      %184 = vperm.xlu0 %183, %v175
      %v185 = vpop.permute.xlu0 %184
      %v187 = vadd.f32 %v182, %v185
      %v188 = vmax.f32 %v187, 0.0
      %189 = vst [vmem:[%s174] sm:$0xff] %v188
      %p190 = scmp.lt.s32.totalorder %s17, 1
      %s191 = scalar_select %p190, %s17, 1
      %p192 = scmp.lt.s32.totalorder %s18, 1
      %s193 = scalar_select %p192, %s18, 1
      %s194 = smul.addr %s191, 2
      %s195 = sadd.s32 %s193, %s194
      %s196 = smul.addr %s195, 8
      %s197 = scalar_lea.vmem %s2, %s196
      // Predicated region
      $region29: #{conv_block_forward.3} parent=27 // pred_check
        %p198 = pneg %p94
      $region30: #{conv_block_forward.3} parent=27 // pred_check_branch
        %200 = sbr.rel (%p198) target = $region32
      $region31: #{conv_block_forward.3} parent=27 // pred_region
        _
      $region32: #{conv_block_forward.3} parent=27 // pred_fallthru
        _
    $region28: #{conv_block_forward.3} parent=5 // pred_fallthru
      _
    %p201 = scmp.le.s32.totalorder 2, %s8
    // Predicated region
    $region33: #{conv_block_forward.3} parent=5 // pred_check
      %p202 = pneg %p201
    $region34: #{conv_block_forward.3} parent=5 // pred_check_branch
      %204 = sbr.rel (%p202) target = $region36
    $region35: #{conv_block_forward.3} parent=5 // pred_region
      %s205 = ssub.s32 %s8, 2
      // Predicated region
      $region37: #{conv_block_forward.3} parent=35 // pred_check
        %p206 = pneg %p100
      $region38: #{conv_block_forward.3} parent=35 // pred_check_branch
        %208 = sbr.rel (%p206) target = $region40
      $region39: #{conv_block_forward.3} parent=35 // pred_region
        %p209 = scmp.lt.s32.totalorder %s19, 1
        %s210 = scalar_select %p209, %s19, 1
        %p211 = scmp.lt.s32.totalorder %s20, 1
        %s212 = scalar_select %p211, %s20, 1
        %s213 = smul.addr %s210, 2
        %s214 = sadd.s32 %s212, %s213
        %s215 = smul.addr %s214, 8
        %s216 = scalar_lea.vmem %s2, %s215
      $region40: #{conv_block_forward.3} parent=35 // pred_fallthru
        _
    $region36: #{conv_block_forward.3} parent=5 // pred_fallthru
      _
  $region6: #{conv_block_forward.3} parent=0 // loop_footer
    %s12 = sadd.s32 1, %s8
  $region7: #{conv_block_forward.3} parent=0 // loop_footer_branch
    %7 = sbr.rel target = $region3
  $region8: #{conv_block_forward.3} parent=0 // loop_exit
    _

// kernel: conv_block_forward.2
$region0: #{conv_block_forward.2}
  #allocation0 [shape = 'u32[]', space=smem, size = 0x4, offset = 0x4, fixed_abs, tag = 'smem constant byte address 0x4 - core index']
  #allocation1 [shape = 'u32[144,128]{1,0:T(1,128)}', space=vmem, size = 0x12000, scoped, tag = 'internal scratch']
  #allocation2 [shape = 'f32[128,128]{1,0:T(8,128)}', space=vmem, size = 0x10000, scoped, tag = 'scratch operand']
  %s0 = inlined_call_operand.vmem [shape: f32[2,4,18,18], index: 0, kind: input, shape index: {}]
  %s1 = inlined_call_operand.vmem [shape: f32[8,128], index: 1, kind: input, shape index: {}]
  %s2 = inlined_call_operand.vmem [shape: f32[2,8,256], index: 2, kind: output, shape index: {0}]
  %s3 = inlined_call_operand.vmem [shape: f32[2,2,8,2], index: 3, kind: output, shape index: {1}]
  %4 = xla_tuple %s2, %s3
  %s5 = sld [smem:[#allocation0]]
  $region49: #{conv_block_forward.2} parent=0
    _
  %s7 = ssub.s32 1, %s5
  %s8 = scalar_select 0, %s7, %s5
  loop: start=0, step=1, limit=6
  $region2: #{conv_block_forward.2} parent=0 // loop_pre_header
    _
  $region3: #{conv_block_forward.2} parent=0 // loop_header
    %s10 = sphi 0, %s14
    %p11 = scmp.ge.s32.totalorder %s10, 6
    %s17 = sphi 0, %s29
    %s18 = sphi 0, %s25
    %s19 = sphi 0, %s17
    %s20 = sphi 0, %s18
    %s21 = sphi 0, %s19
    %s22 = sphi 0, %s20
    %s32 = sphi 0, %s34
    %s35 = sphi 0, %s32
    %s36 = sphi 0, %s35
    %s52 = sphi 0, %s36
    %s56 = sphi 0, %s56
    %s58 = sphi 0, %s56
    %s59 = sphi 0, %s58
    %s73 = sphi 0, %s59
    %s81 = sphi 0, %s83
    %s84 = sphi 0, %s81
    %s85 = sphi 0, %s84
    %s101 = sphi 0, %s85
    %s109 = sphi 0, %s111
    %s112 = sphi 0, %s109
    %s113 = sphi 0, %s112
    %s129 = sphi 0, %s113
  $region4: #{conv_block_forward.2} parent=0 // loop_header_branch
    %13 = sbr.rel (%p11) target = $region8
  $region5: #{conv_block_forward.2} parent=0 // loop_body
    %s15 = ssub.s32 %s10, 1
    %s16 = ssub.s32 %s10, 2
    %s23 = sadd.s32 1, %s18
    %p24 = scmp.ge.s32.totalorder %s23, 2
    %s25 = scalar_select %p24, 0, %s23
    %s26 = sadd.s32 1, %s17
    %s27 = scalar_select %p24, %s26, %s17
    %p28 = scmp.ge.s32.totalorder %s27, 2
    %s29 = scalar_select %p28, 0, %s27
    %s30 = ssub.s32 %s17, %s29
    %p31 = scmp.eq.s32.totalorder %s30, 0
    %s33 = sadd.s32 %s32, 1
    %s34 = scalar_select %p31, %s32, %s33
    %p37 = pneg %p31
    %p38 = scmp.eq.s32.totalorder %s10, 3
    %p39 = por %p37, %p38
    %p40 = scmp.ne.s32.totalorder %s32, %s35
    %p41 = scmp.eq.s32.totalorder %s10, 0
    %p42 = por %p40, %p41
    %p43 = scmp.ne.s32.totalorder %s32, %s35
    %p44 = scmp.eq.s32.totalorder %s15, 3
    %p45 = por %p43, %p44
    %p46 = scmp.ne.s32.totalorder %s35, %s36
    %p47 = scmp.eq.s32.totalorder %s15, 0
    %p48 = por %p46, %p47
    %p49 = scmp.ne.s32.totalorder %s35, %s36
    %p50 = scmp.eq.s32.totalorder %s16, 3
    %p51 = por %p49, %p50
    %p53 = scmp.ne.s32.totalorder %s36, %s52
    %p54 = scmp.eq.s32.totalorder %s16, 0
    %p55 = por %p53, %p54
    %s57 = sadd.s32 %s56, 1
    %p60 = scmp.eq.s32.totalorder %s10, 3
    %p61 = scmp.ne.s32.totalorder %s56, %s58
    %p62 = scmp.eq.s32.totalorder %s10, 0
    %p63 = por %p61, %p62
    %p64 = scmp.ne.s32.totalorder %s56, %s58
    %p65 = scmp.eq.s32.totalorder %s15, 3
    %p66 = por %p64, %p65
    %p67 = scmp.ne.s32.totalorder %s58, %s59
    %p68 = scmp.eq.s32.totalorder %s15, 0
    %p69 = por %p67, %p68
    %p70 = scmp.ne.s32.totalorder %s58, %s59
    %p71 = scmp.eq.s32.totalorder %s16, 3
    %p72 = por %p70, %p71
    %p74 = scmp.ne.s32.totalorder %s59, %s73
    %p75 = scmp.eq.s32.totalorder %s16, 0
    %p76 = por %p74, %p75
    %s77 = ssub.s32 %s17, %s29
    %s78 = ssub.s32 %s18, %s25
    %s79 = sor.u32 %s77, %s78
    %p80 = scmp.eq.s32.totalorder %s79, 0
    %s82 = sadd.s32 %s81, 1
    %s83 = scalar_select %p80, %s81, %s82
    %p86 = pneg %p80
    %p87 = scmp.eq.s32.totalorder %s10, 3
    %p88 = por %p86, %p87
    %p89 = scmp.ne.s32.totalorder %s81, %s84
    %p90 = scmp.eq.s32.totalorder %s10, 0
    %p91 = por %p89, %p90
    %p92 = scmp.ne.s32.totalorder %s81, %s84
    %p93 = scmp.eq.s32.totalorder %s15, 3
    %p94 = por %p92, %p93
    %p95 = scmp.ne.s32.totalorder %s84, %s85
    %p96 = scmp.eq.s32.totalorder %s15, 0
    %p97 = por %p95, %p96
    %p98 = scmp.ne.s32.totalorder %s84, %s85
    %p99 = scmp.eq.s32.totalorder %s16, 3
    %p100 = por %p98, %p99
    %p102 = scmp.ne.s32.totalorder %s85, %s101
    %p103 = scmp.eq.s32.totalorder %s16, 0
    %p104 = por %p102, %p103
    %s105 = ssub.s32 %s17, %s29
    %s106 = ssub.s32 %s18, %s25
    %s107 = sor.u32 %s105, %s106
    %p108 = scmp.eq.s32.totalorder %s107, 0
    %s110 = sadd.s32 %s109, 1
    %s111 = scalar_select %p108, %s109, %s110
    %p114 = pneg %p108
    %p115 = scmp.eq.s32.totalorder %s10, 3
    %p116 = por %p114, %p115
    %p117 = scmp.ne.s32.totalorder %s109, %s112
    %p118 = scmp.eq.s32.totalorder %s10, 0
    %p119 = por %p117, %p118
    %p120 = scmp.ne.s32.totalorder %s109, %s112
    %p121 = scmp.eq.s32.totalorder %s15, 3
    %p122 = por %p120, %p121
    %p123 = scmp.ne.s32.totalorder %s112, %s113
    %p124 = scmp.eq.s32.totalorder %s15, 0
    %p125 = por %p123, %p124
    %p126 = scmp.ne.s32.totalorder %s112, %s113
    %p127 = scmp.eq.s32.totalorder %s16, 3
    %p128 = por %p126, %p127
    %p130 = scmp.ne.s32.totalorder %s113, %s129
    %p131 = scmp.eq.s32.totalorder %s16, 0
    %p132 = por %p130, %p131
    %p133 = scmp.le.s32.totalorder 1, %s10
    %p134 = scmp.lt.s32.totalorder %s10, 5
    %p135 = pnand %p133, %p134
    %p136 = pneg %p135
    // Predicated region
    $region9: #{conv_block_forward.2} parent=5 // pred_check
      _
    $region10: #{conv_block_forward.2} parent=5 // pred_check_branch
      %138 = sbr.rel (%p135) target = $region12
    $region11: #{conv_block_forward.2} parent=5 // pred_region
      %s139 = ssub.s32 %s10, 1
      // Predicated region
      $region13: #{conv_block_forward.2} parent=11 // pred_check
        %p140 = pneg %p69
      $region14: #{conv_block_forward.2} parent=11 // pred_check_branch
        %142 = sbr.rel (%p140) target = $region16
      $region15: #{conv_block_forward.2} parent=11 // pred_region
        _
      $region16: #{conv_block_forward.2} parent=11 // pred_fallthru
        _
    $region12: #{conv_block_forward.2} parent=5 // pred_fallthru
      _
    %p143 = scmp.lt.s32.totalorder %s10, 4
    // Predicated region
    $region17: #{conv_block_forward.2} parent=5 // pred_check
      %p144 = pneg %p143
    $region18: #{conv_block_forward.2} parent=5 // pred_check_branch
      %146 = sbr.rel (%p144) target = $region20
    $region19: #{conv_block_forward.2} parent=5 // pred_region
      // Predicated region
      $region21: #{conv_block_forward.2} parent=19 // pred_check
        %p147 = pneg %p42
      $region22: #{conv_block_forward.2} parent=19 // pred_check_branch
        %149 = sbr.rel (%p147) target = $region24
      $region23: #{conv_block_forward.2} parent=19 // pred_region
        %p150 = scmp.lt.s32.totalorder %s17, 1
        %s151 = scalar_select %p150, %s17, 1
        %s152 = smul.addr %s151, 12
        %s153 = smul.addr %s152, 8
        %s154 = scalar_lea.vmem %s0, %s153
      $region24: #{conv_block_forward.2} parent=19 // pred_fallthru
        _
    $region20: #{conv_block_forward.2} parent=5 // pred_fallthru
      _
    %p155 = scmp.le.s32.totalorder 1, %s10
    %p156 = scmp.lt.s32.totalorder %s10, 5
    %p157 = pnand %p155, %p156
    %p158 = pneg %p157
    // Predicated region
    $region25: #{conv_block_forward.2} parent=5 // pred_check
      _
    $region26: #{conv_block_forward.2} parent=5 // pred_check_branch
      %160 = sbr.rel (%p157) target = $region28
    $region27: #{conv_block_forward.2} parent=5 // pred_region
      %s161 = ssub.s32 %s10, 1
      %p162 = scmp.lt.s32.totalorder %s19, 1
      %s163 = scalar_select %p162, %s19, 1
      %s164 = smul.addr %s163, 12
      %s165 = smul.addr %s164, 8
      %s166 = scalar_lea.vmem %s0, %s165
      %p167 = pneg %p48
      %p168 = pneg %p45
      %p169 = pneg %p69
      %p170 = pneg %p66
      %p171 = pneg %p97
      %p172 = pneg %p94
      %p173 = scmp.lt.s32.totalorder %s19, 1
      %s174 = scalar_select %p173, %s19, 1
      %p175 = scmp.lt.s32.totalorder %s20, 1
      %s176 = scalar_select %p175, %s20, 1
      %s177 = smul.addr %s174, 2
      %s178 = sadd.s32 %s176, %s177
      %s179 = smul.addr %s178, 8
      %s180 = scalar_lea.vmem %s2, %s179
      %p181 = pneg %p125
      %p182 = pneg %p122
      %p183 = scmp.lt.s32.totalorder %s19, 1
      %s184 = scalar_select %p183, %s19, 1
      %p185 = scmp.lt.s32.totalorder %s20, 1
      %s186 = scalar_select %p185, %s20, 1
      %s187 = smul.addr %s184, 2
      %s188 = sadd.s32 %s186, %s187
      %s189 = smul.addr %s188, 8
      %s190 = scalar_lea.vmem %s3, %s189
      %p191 = scmp.lt.s32.totalorder %s19, 1
      %s192 = scalar_select %p191, %s19, 1
      %s193 = smul.addr %s192, 12
      %s194 = smul.addr %s193, 8
      %s195 = scalar_lea.vmem %s0, %s194
      %p196 = scmp.lt.s32.totalorder %s19, 1
      %s197 = scalar_select %p196, %s19, 1
      %p198 = scmp.lt.s32.totalorder %s20, 1
      %s199 = scalar_select %p198, %s20, 1
      %s200 = smul.addr %s197, 2
      %s201 = sadd.s32 %s199, %s200
      %s202 = smul.addr %s201, 8
      %s203 = scalar_lea.vmem %s2, %s202
      %p204 = scmp.lt.s32.totalorder %s19, 1
      %s205 = scalar_select %p204, %s19, 1
      %p206 = scmp.lt.s32.totalorder %s20, 1
      %s207 = scalar_select %p206, %s20, 1
      %s208 = smul.addr %s205, 2
      %s209 = sadd.s32 %s207, %s208
      %s210 = smul.addr %s209, 8
      %s211 = scalar_lea.vmem %s3, %s210
      %s212 = smul.u32 %s20, 8
      %s213 = scalar_lea.vmem %s195, %s212
      %v214 = vld [vmem:[%s213] sm:$0xff]
      %v215 = vld [vmem:[%s213 + $0x8] sm:$0x3]
      %v216 = vld [vmem:[%s213 + $0x18] sm:$0xff]
      %v217 = vld [vmem:[%s213 + $0x20] sm:$0x3]
      %v218 = vld [vmem:[%s213 + $0x30] sm:$0xff]
      %v219 = vld [vmem:[%s213 + $0x38] sm:$0x3]
      %v220 = vld [vmem:[%s213 + $0x48] sm:$0xff]
      %v221 = vld [vmem:[%s213 + $0x50] sm:$0x3]
      %222 = vst [vmem:[#allocation2] sm:$0xff] 0.0
      %223 = vst [vmem:[#allocation2 + $0x8] sm:$0xff] 0.0
      %224 = vst [vmem:[#allocation2 + $0x10] sm:$0xff] 0.0
      %225 = vst [vmem:[#allocation2 + $0x18] sm:$0xff] 0.0
      %226 = vst [vmem:[#allocation2 + $0x20] sm:$0xff] 0.0
      %227 = vst [vmem:[#allocation2 + $0x28] sm:$0xff] 0.0
      %228 = vst [vmem:[#allocation2 + $0x30] sm:$0xff] 0.0
      %229 = vst [vmem:[#allocation2 + $0x38] sm:$0xff] 0.0
      %230 = vst [vmem:[#allocation2 + $0x40] sm:$0xff] 0.0
      %231 = vst [vmem:[#allocation2 + $0x48] sm:$0xff] 0.0
      %232 = vst [vmem:[#allocation2 + $0x50] sm:$0xff] 0.0
      %233 = vst [vmem:[#allocation2 + $0x58] sm:$0xff] 0.0
      %234 = vst [vmem:[#allocation2 + $0x60] sm:$0xff] 0.0
      %235 = vst [vmem:[#allocation2 + $0x68] sm:$0xff] 0.0
      %236 = vst [vmem:[#allocation2 + $0x70] sm:$0xff] 0.0
      %237 = vst [vmem:[#allocation2 + $0x78] sm:$0xff] 0.0
      %v242 = vrot.slane %v216, 7
      %vm243 = vcmask 1041409
      %v244 = vsel %vm243, %v242, %v214
      %v245 = vrot.slane %v218, 6
      %vm246 = vcmask 1042434
      %v247 = vsel %vm246, %v245, %v244
      %v248 = vrot.slane %v220, 5
      %vm249 = vcmask 1043459
      %v250 = vsel %vm249, %v248, %v247
      %vm252 = vcmask 125952
      %253 = vst.msk [vmem:[#allocation2] sm:$0xf] %vm252, %v250
      %v254 = vsel %vm246, %v242, %v214
      %v255 = vsel %vm249, %v245, %v254
      %vm256 = vcmask 1044484
      %v257 = vsel %vm256, %v248, %v255
      %258 = vrot.lane.b32.xlu0 %v257, 16
      %v259 = vpop.permute.xlu0 %258
      %vm261 = vcmask 258177
      %262 = vst.msk [vmem:[#allocation2 - $0x1] sm:$0x1e] %vm261, %v259
      %v263 = vsel %vm249, %v242, %v214
      %v264 = vsel %vm256, %v245, %v263
      %vm265 = vcmask 1045509
      %v266 = vsel %vm265, %v248, %v264
      %267 = vrot.lane.b32.xlu0 %v266, 32
      %v268 = vpop.permute.xlu0 %267
      %vm270 = vcmask 390402
      %271 = vst.msk [vmem:[#allocation2 - $0x2] sm:$0x3c] %vm270, %v268
      %v272 = vsel %vm256, %v242, %v214
      %v273 = vsel %vm265, %v245, %v272
      %vm274 = vcmask 1046534
      %v275 = vsel %vm274, %v248, %v273
      %276 = vrot.lane.b32.xlu0 %v275, 48
      %v277 = vpop.permute.xlu0 %276
      %vm279 = vcmask 522627
      %280 = vst.msk [vmem:[#allocation2 - $0x3] sm:$0x78] %vm279, %v277
      %v281 = vsel %vm265, %v242, %v214
      %v282 = vsel %vm274, %v245, %v281
      %vm283 = vcmask 1047559
      %v284 = vsel %vm283, %v248, %v282
      %285 = vrot.lane.b32.xlu0 %v284, 64
      %v286 = vpop.permute.xlu0 %285
      %vm288 = vcmask 654852
      %289 = vst.msk [vmem:[#allocation2 - $0x4] sm:$0xf0] %vm288, %v286
      %v290 = vsel %vm274, %v242, %v214
      %v291 = vsel %vm283, %v245, %v290
      %292 = vrot.lane.b32.xlu0 %v291, 80
      %v293 = vpop.permute.xlu0 %292
      %294 = vrot.lane.b32.xlu0 %v248, 80
      %v295 = vpop.permute.xlu0 %294
      %vm298 = vcmask 786053
      %299 = vst.msk [vmem:[#allocation2 - $0x5] sm:$0xe0] %vm298, %v293
      %vm300 = vcmask 778880
      %301 = vst.msk [vmem:[#allocation2 + $0x3] sm:$0x1] %vm300, %v295
      %v302 = vsel %vm283, %v242, %v214
      %v303 = vsel %vm243, %v248, %v245
      %304 = vrot.lane.b32.xlu0 %v302, 96
      %v305 = vpop.permute.xlu0 %304
      %306 = vrot.lane.b32.xlu0 %v303, 96
      %v307 = vpop.permute.xlu0 %306
      %vm310 = vcmask 917254
      %311 = vst.msk [vmem:[#allocation2 - $0x6] sm:$0xc0] %vm310, %v305
      %vm312 = vcmask 911104
      %313 = vst.msk [vmem:[#allocation2 + $0x2] sm:$0x3] %vm312, %v307
      %v314 = vsel %vm243, %v245, %v242
      %v315 = vsel %vm246, %v248, %v314
      %316 = vrot.lane.b32.xlu0 %v214, 112
      %v317 = vpop.permute.xlu0 %316
      %318 = vrot.lane.b32.xlu0 %v315, 112
      %v319 = vpop.permute.xlu0 %318
      %vm322 = vcmask 1048455
      %323 = vst.msk [vmem:[#allocation2 - $0x7] sm:$0x80] %vm322, %v317
      %vm324 = vcmask 1043328
      %325 = vst.msk [vmem:[#allocation2 + $0x1] sm:$0x7] %vm324, %v319
      %326 = vrot.lane.b32.xlu0 %v250, 127
      %v327 = vpop.permute.xlu0 %326
      %329 = vst.msk [vmem:[#allocation2 + $0x4] sm:$0xf] %vm252, %v327
      %330 = vrot.lane.b32.xlu0 %v257, 15
      %v331 = vpop.permute.xlu0 %330
      %333 = vst.msk [vmem:[#allocation2 + $0x3] sm:$0x1e] %vm261, %v331
      %334 = vrot.lane.b32.xlu0 %v266, 31
      %v335 = vpop.permute.xlu0 %334
      %337 = vst.msk [vmem:[#allocation2 + $0x2] sm:$0x3c] %vm270, %v335
      %338 = vrot.lane.b32.xlu0 %v275, 47
      %v339 = vpop.permute.xlu0 %338
      %341 = vst.msk [vmem:[#allocation2 + $0x1] sm:$0x78] %vm279, %v339
      %342 = vrot.lane.b32.xlu0 %v284, 63
      %v343 = vpop.permute.xlu0 %342
      %345 = vst.msk [vmem:[#allocation2] sm:$0xf0] %vm288, %v343
      %346 = vrot.lane.b32.xlu0 %v291, 79
      %v347 = vpop.permute.xlu0 %346
      %348 = vrot.lane.b32.xlu0 %v248, 79
      %v349 = vpop.permute.xlu0 %348
      %352 = vst.msk [vmem:[#allocation2 - $0x1] sm:$0xe0] %vm298, %v347
      %353 = vst.msk [vmem:[#allocation2 + $0x7] sm:$0x1] %vm300, %v349
      %354 = vrot.lane.b32.xlu0 %v302, 95
      %v355 = vpop.permute.xlu0 %354
      %356 = vrot.lane.b32.xlu0 %v303, 95
      %v357 = vpop.permute.xlu0 %356
      %360 = vst.msk [vmem:[#allocation2 - $0x2] sm:$0xc0] %vm310, %v355
      %361 = vst.msk [vmem:[#allocation2 + $0x6] sm:$0x3] %vm312, %v357
      %362 = vrot.lane.b32.xlu0 %v214, 111
      %v363 = vpop.permute.xlu0 %362
      %364 = vrot.lane.b32.xlu0 %v315, 111
      %v365 = vpop.permute.xlu0 %364
      %368 = vst.msk [vmem:[#allocation2 - $0x3] sm:$0x80] %vm322, %v363
      %369 = vst.msk [vmem:[#allocation2 + $0x5] sm:$0x7] %vm324, %v365
      %370 = vrot.lane.b32.xlu0 %v250, 126
      %v371 = vpop.permute.xlu0 %370
      %373 = vst.msk [vmem:[#allocation2 + $0x8] sm:$0xf] %vm252, %v371
      %374 = vrot.lane.b32.xlu0 %v257, 14
      %v375 = vpop.permute.xlu0 %374
      %377 = vst.msk [vmem:[#allocation2 + $0x7] sm:$0x1e] %vm261, %v375
      %378 = vrot.lane.b32.xlu0 %v266, 30
      %v379 = vpop.permute.xlu0 %378
      %381 = vst.msk [vmem:[#allocation2 + $0x6] sm:$0x3c] %vm270, %v379
      %382 = vrot.lane.b32.xlu0 %v275, 46
      %v383 = vpop.permute.xlu0 %382
      %385 = vst.msk [vmem:[#allocation2 + $0x5] sm:$0x78] %vm279, %v383
      %386 = vrot.lane.b32.xlu0 %v284, 62
      %v387 = vpop.permute.xlu0 %386
      %389 = vst.msk [vmem:[#allocation2 + $0x4] sm:$0xf0] %vm288, %v387
      %390 = vrot.lane.b32.xlu0 %v291, 78
      %v391 = vpop.permute.xlu0 %390
      %392 = vrot.lane.b32.xlu0 %v248, 78
      %v393 = vpop.permute.xlu0 %392
      %396 = vst.msk [vmem:[#allocation2 + $0x3] sm:$0xe0] %vm298, %v391
      %397 = vst.msk [vmem:[#allocation2 + $0xb] sm:$0x1] %vm300, %v393
      %398 = vrot.lane.b32.xlu0 %v302, 94
      %v399 = vpop.permute.xlu0 %398
      %400 = vrot.lane.b32.xlu0 %v303, 94
      %v401 = vpop.permute.xlu0 %400
      %404 = vst.msk [vmem:[#allocation2 + $0x2] sm:$0xc0] %vm310, %v399
      %405 = vst.msk [vmem:[#allocation2 + $0xa] sm:$0x3] %vm312, %v401
      %406 = vrot.lane.b32.xlu0 %v214, 110
      %v407 = vpop.permute.xlu0 %406
      %408 = vrot.lane.b32.xlu0 %v315, 110
      %v409 = vpop.permute.xlu0 %408
      %412 = vst.msk [vmem:[#allocation2 + $0x1] sm:$0x80] %vm322, %v407
      %413 = vst.msk [vmem:[#allocation2 + $0x9] sm:$0x7] %vm324, %v409
      %vm415 = vcmask 126977
      %416 = vst.msk [vmem:[#allocation2 + $0xb] sm:$0x1e] %vm415, %v257
      %417 = vrot.lane.b32.xlu0 %v266, 16
      %v418 = vpop.permute.xlu0 %417
      %vm420 = vcmask 259202
      %421 = vst.msk [vmem:[#allocation2 + $0xa] sm:$0x3c] %vm420, %v418
      %422 = vrot.lane.b32.xlu0 %v275, 32
      %v423 = vpop.permute.xlu0 %422
      %vm425 = vcmask 391427
      %426 = vst.msk [vmem:[#allocation2 + $0x9] sm:$0x78] %vm425, %v423
      %427 = vrot.lane.b32.xlu0 %v284, 48
      %v428 = vpop.permute.xlu0 %427
      %vm430 = vcmask 523652
      %431 = vst.msk [vmem:[#allocation2 + $0x8] sm:$0xf0] %vm430, %v428
      %432 = vrot.lane.b32.xlu0 %v291, 64
      %v433 = vpop.permute.xlu0 %432
      %434 = vrot.lane.b32.xlu0 %v248, 64
      %v435 = vpop.permute.xlu0 %434
      %vm438 = vcmask 654853
      %439 = vst.msk [vmem:[#allocation2 + $0x7] sm:$0xe0] %vm438, %v433
      %vm440 = vcmask 647680
      %441 = vst.msk [vmem:[#allocation2 + $0xf] sm:$0x1] %vm440, %v435
      %442 = vrot.lane.b32.xlu0 %v302, 80
      %v443 = vpop.permute.xlu0 %442
      %444 = vrot.lane.b32.xlu0 %v303, 80
      %v445 = vpop.permute.xlu0 %444
      %vm448 = vcmask 786054
      %449 = vst.msk [vmem:[#allocation2 + $0x6] sm:$0xc0] %vm448, %v443
      %vm450 = vcmask 779904
      %451 = vst.msk [vmem:[#allocation2 + $0xe] sm:$0x3] %vm450, %v445
      %452 = vrot.lane.b32.xlu0 %v214, 96
      %v453 = vpop.permute.xlu0 %452
      %454 = vrot.lane.b32.xlu0 %v315, 96
      %v455 = vpop.permute.xlu0 %454
      %vm458 = vcmask 917255
      %459 = vst.msk [vmem:[#allocation2 + $0x5] sm:$0x80] %vm458, %v453
      %vm460 = vcmask 912128
      %461 = vst.msk [vmem:[#allocation2 + $0xd] sm:$0x7] %vm460, %v455
      %v466 = vrot.slane %v217, 7
      %v467 = vsel %vm243, %v466, %v215
      %v468 = vrot.slane %v219, 6
      %v469 = vsel %vm246, %v468, %v467
      %v470 = vrot.slane %v221, 5
      %v471 = vsel %vm249, %v470, %v469
      %472 = vrot.lane.b32.xlu0 %v471, 112
      %v473 = vpop.permute.xlu0 %472
      %vm475 = vcmask 1044352
      %476 = vst.msk [vmem:[#allocation2 + $0xc] sm:$0xf] %vm475, %v473
      %477 = vrot.lane.b32.xlu0 %v257, 127
      %v478 = vpop.permute.xlu0 %477
      %480 = vst.msk [vmem:[#allocation2 + $0xf] sm:$0x1e] %vm415, %v478
      %481 = vrot.lane.b32.xlu0 %v266, 15
      %v482 = vpop.permute.xlu0 %481
      %484 = vst.msk [vmem:[#allocation2 + $0xe] sm:$0x3c] %vm420, %v482
      %485 = vrot.lane.b32.xlu0 %v275, 31
      %v486 = vpop.permute.xlu0 %485
      %488 = vst.msk [vmem:[#allocation2 + $0xd] sm:$0x78] %vm425, %v486
      %489 = vrot.lane.b32.xlu0 %v284, 47
      %v490 = vpop.permute.xlu0 %489
      %492 = vst.msk [vmem:[#allocation2 + $0xc] sm:$0xf0] %vm430, %v490
      %493 = vrot.lane.b32.xlu0 %v291, 63
      %v494 = vpop.permute.xlu0 %493
      %495 = vrot.lane.b32.xlu0 %v248, 63
      %v496 = vpop.permute.xlu0 %495
      %499 = vst.msk [vmem:[#allocation2 + $0xb] sm:$0xe0] %vm438, %v494
      %500 = vst.msk [vmem:[#allocation2 + $0x13] sm:$0x1] %vm440, %v496
      %501 = vrot.lane.b32.xlu0 %v302, 79
      %v502 = vpop.permute.xlu0 %501
      %503 = vrot.lane.b32.xlu0 %v303, 79
      %v504 = vpop.permute.xlu0 %503
      %507 = vst.msk [vmem:[#allocation2 + $0xa] sm:$0xc0] %vm448, %v502
      %508 = vst.msk [vmem:[#allocation2 + $0x12] sm:$0x3] %vm450, %v504
      %509 = vrot.lane.b32.xlu0 %v214, 95
      %v510 = vpop.permute.xlu0 %509
      %511 = vrot.lane.b32.xlu0 %v315, 95
      %v512 = vpop.permute.xlu0 %511
      %515 = vst.msk [vmem:[#allocation2 + $0x9] sm:$0x80] %vm458, %v510
      %516 = vst.msk [vmem:[#allocation2 + $0x11] sm:$0x7] %vm460, %v512
      %517 = vrot.lane.b32.xlu0 %v471, 111
      %v518 = vpop.permute.xlu0 %517
      %520 = vst.msk [vmem:[#allocation2 + $0x10] sm:$0xf] %vm475, %v518
      %521 = vrot.lane.b32.xlu0 %v257, 126
      %v522 = vpop.permute.xlu0 %521
      %524 = vst.msk [vmem:[#allocation2 + $0x13] sm:$0x1e] %vm415, %v522
      %525 = vrot.lane.b32.xlu0 %v266, 14
      %v526 = vpop.permute.xlu0 %525
      %528 = vst.msk [vmem:[#allocation2 + $0x12] sm:$0x3c] %vm420, %v526
      %529 = vrot.lane.b32.xlu0 %v275, 30
      %v530 = vpop.permute.xlu0 %529
      %532 = vst.msk [vmem:[#allocation2 + $0x11] sm:$0x78] %vm425, %v530
      %533 = vrot.lane.b32.xlu0 %v284, 46
      %v534 = vpop.permute.xlu0 %533
      %536 = vst.msk [vmem:[#allocation2 + $0x10] sm:$0xf0] %vm430, %v534
      %537 = vrot.lane.b32.xlu0 %v291, 62
      %v538 = vpop.permute.xlu0 %537
      %539 = vrot.lane.b32.xlu0 %v248, 62
      %v540 = vpop.permute.xlu0 %539
      %543 = vst.msk [vmem:[#allocation2 + $0xf] sm:$0xe0] %vm438, %v538
      %544 = vst.msk [vmem:[#allocation2 + $0x17] sm:$0x1] %vm440, %v540
      %545 = vrot.lane.b32.xlu0 %v302, 78
      %v546 = vpop.permute.xlu0 %545
      %547 = vrot.lane.b32.xlu0 %v303, 78
      %v548 = vpop.permute.xlu0 %547
      %551 = vst.msk [vmem:[#allocation2 + $0xe] sm:$0xc0] %vm448, %v546
      %552 = vst.msk [vmem:[#allocation2 + $0x16] sm:$0x3] %vm450, %v548
      %553 = vrot.lane.b32.xlu0 %v214, 94
      %v554 = vpop.permute.xlu0 %553
      %555 = vrot.lane.b32.xlu0 %v315, 94
      %v556 = vpop.permute.xlu0 %555
      %559 = vst.msk [vmem:[#allocation2 + $0xd] sm:$0x80] %vm458, %v554
      %560 = vst.msk [vmem:[#allocation2 + $0x15] sm:$0x7] %vm460, %v556
      %561 = vrot.lane.b32.xlu0 %v471, 110
      %v562 = vpop.permute.xlu0 %561
      %564 = vst.msk [vmem:[#allocation2 + $0x14] sm:$0xf] %vm475, %v562
      %vm566 = vcmask 128002
      %567 = vst.msk [vmem:[#allocation2 + $0x16] sm:$0x3c] %vm566, %v266
      %568 = vrot.lane.b32.xlu0 %v275, 16
      %v569 = vpop.permute.xlu0 %568
      %vm571 = vcmask 260227
      %572 = vst.msk [vmem:[#allocation2 + $0x15] sm:$0x78] %vm571, %v569
      %573 = vrot.lane.b32.xlu0 %v284, 32
      %v574 = vpop.permute.xlu0 %573
      %vm576 = vcmask 392452
      %577 = vst.msk [vmem:[#allocation2 + $0x14] sm:$0xf0] %vm576, %v574
      %578 = vrot.lane.b32.xlu0 %v291, 48
      %v579 = vpop.permute.xlu0 %578
      %580 = vrot.lane.b32.xlu0 %v248, 48
      %v581 = vpop.permute.xlu0 %580
      %vm584 = vcmask 523653
      %585 = vst.msk [vmem:[#allocation2 + $0x13] sm:$0xe0] %vm584, %v579
      %vm586 = vcmask 516480
      %587 = vst.msk [vmem:[#allocation2 + $0x1b] sm:$0x1] %vm586, %v581
      %588 = vrot.lane.b32.xlu0 %v302, 64
      %v589 = vpop.permute.xlu0 %588
      %590 = vrot.lane.b32.xlu0 %v303, 64
      %v591 = vpop.permute.xlu0 %590
      %vm594 = vcmask 654854
      %595 = vst.msk [vmem:[#allocation2 + $0x12] sm:$0xc0] %vm594, %v589
      %vm596 = vcmask 648704
      %597 = vst.msk [vmem:[#allocation2 + $0x1a] sm:$0x3] %vm596, %v591
      %598 = vrot.lane.b32.xlu0 %v214, 80
      %v599 = vpop.permute.xlu0 %598
      %600 = vrot.lane.b32.xlu0 %v315, 80
      %v601 = vpop.permute.xlu0 %600
      %vm604 = vcmask 786055
      %605 = vst.msk [vmem:[#allocation2 + $0x11] sm:$0x80] %vm604, %v599
      %vm606 = vcmask 780928
      %607 = vst.msk [vmem:[#allocation2 + $0x19] sm:$0x7] %vm606, %v601
      %608 = vrot.lane.b32.xlu0 %v471, 96
      %v609 = vpop.permute.xlu0 %608
      %vm611 = vcmask 913152
      %612 = vst.msk [vmem:[#allocation2 + $0x18] sm:$0xf] %vm611, %v609
      %v613 = vsel %vm246, %v466, %v215
      %v614 = vsel %vm249, %v468, %v613
      %v615 = vsel %vm256, %v470, %v614
      %616 = vrot.lane.b32.xlu0 %v615, 112
      %v617 = vpop.permute.xlu0 %616
      %vm619 = vcmask 1045377
      %620 = vst.msk [vmem:[#allocation2 + $0x17] sm:$0x1e] %vm619, %v617
      %621 = vrot.lane.b32.xlu0 %v266, 127
      %v622 = vpop.permute.xlu0 %621
      %624 = vst.msk [vmem:[#allocation2 + $0x1a] sm:$0x3c] %vm566, %v622
      %625 = vrot.lane.b32.xlu0 %v275, 15
      %v626 = vpop.permute.xlu0 %625
      %628 = vst.msk [vmem:[#allocation2 + $0x19] sm:$0x78] %vm571, %v626
      %629 = vrot.lane.b32.xlu0 %v284, 31
      %v630 = vpop.permute.xlu0 %629
      %632 = vst.msk [vmem:[#allocation2 + $0x18] sm:$0xf0] %vm576, %v630
      %633 = vrot.lane.b32.xlu0 %v291, 47
      %v634 = vpop.permute.xlu0 %633
      %635 = vrot.lane.b32.xlu0 %v248, 47
      %v636 = vpop.permute.xlu0 %635
      %639 = vst.msk [vmem:[#allocation2 + $0x17] sm:$0xe0] %vm584, %v634
      %640 = vst.msk [vmem:[#allocation2 + $0x1f] sm:$0x1] %vm586, %v636
      %641 = vrot.lane.b32.xlu0 %v302, 63
      %v642 = vpop.permute.xlu0 %641
      %643 = vrot.lane.b32.xlu0 %v303, 63
      %v644 = vpop.permute.xlu0 %643
      %647 = vst.msk [vmem:[#allocation2 + $0x16] sm:$0xc0] %vm594, %v642
      %648 = vst.msk [vmem:[#allocation2 + $0x1e] sm:$0x3] %vm596, %v644
      %649 = vrot.lane.b32.xlu0 %v214, 79
      %v650 = vpop.permute.xlu0 %649
      %651 = vrot.lane.b32.xlu0 %v315, 79
      %v652 = vpop.permute.xlu0 %651
      %655 = vst.msk [vmem:[#allocation2 + $0x15] sm:$0x80] %vm604, %v650
      %656 = vst.msk [vmem:[#allocation2 + $0x1d] sm:$0x7] %vm606, %v652
      %657 = vrot.lane.b32.xlu0 %v471, 95
      %v658 = vpop.permute.xlu0 %657
      %660 = vst.msk [vmem:[#allocation2 + $0x1c] sm:$0xf] %vm611, %v658
      %661 = vrot.lane.b32.xlu0 %v615, 111
      %v662 = vpop.permute.xlu0 %661
      %664 = vst.msk [vmem:[#allocation2 + $0x1b] sm:$0x1e] %vm619, %v662
      %665 = vrot.lane.b32.xlu0 %v266, 126
      %v666 = vpop.permute.xlu0 %665
      %668 = vst.msk [vmem:[#allocation2 + $0x1e] sm:$0x3c] %vm566, %v666
      %669 = vrot.lane.b32.xlu0 %v275, 14
      %v670 = vpop.permute.xlu0 %669
      %672 = vst.msk [vmem:[#allocation2 + $0x1d] sm:$0x78] %vm571, %v670
      %673 = vrot.lane.b32.xlu0 %v284, 30
      %v674 = vpop.permute.xlu0 %673
      %676 = vst.msk [vmem:[#allocation2 + $0x1c] sm:$0xf0] %vm576, %v674
      %677 = vrot.lane.b32.xlu0 %v291, 46
      %v678 = vpop.permute.xlu0 %677
      %679 = vrot.lane.b32.xlu0 %v248, 46
      %v680 = vpop.permute.xlu0 %679
      %683 = vst.msk [vmem:[#allocation2 + $0x1b] sm:$0xe0] %vm584, %v678
      %684 = vst.msk [vmem:[#allocation2 + $0x23] sm:$0x1] %vm586, %v680
      %685 = vrot.lane.b32.xlu0 %v302, 62
      %v686 = vpop.permute.xlu0 %685
      %687 = vrot.lane.b32.xlu0 %v303, 62
      %v688 = vpop.permute.xlu0 %687
      %691 = vst.msk [vmem:[#allocation2 + $0x1a] sm:$0xc0] %vm594, %v686
      %692 = vst.msk [vmem:[#allocation2 + $0x22] sm:$0x3] %vm596, %v688
      %693 = vrot.lane.b32.xlu0 %v214, 78
      %v694 = vpop.permute.xlu0 %693
      %695 = vrot.lane.b32.xlu0 %v315, 78
      %v696 = vpop.permute.xlu0 %695
      %699 = vst.msk [vmem:[#allocation2 + $0x19] sm:$0x80] %vm604, %v694
      %700 = vst.msk [vmem:[#allocation2 + $0x21] sm:$0x7] %vm606, %v696
      %701 = vrot.lane.b32.xlu0 %v471, 94
      %v702 = vpop.permute.xlu0 %701
      %704 = vst.msk [vmem:[#allocation2 + $0x20] sm:$0xf] %vm611, %v702
      %705 = vrot.lane.b32.xlu0 %v615, 110
      %v706 = vpop.permute.xlu0 %705
      %708 = vst.msk [vmem:[#allocation2 + $0x1f] sm:$0x1e] %vm619, %v706
      %v709 = vld [vmem:[%s1] sm:$0xff]
      %v710 = vld [vmem:[#allocation2] sm:$0xff]
      %v711 = vld [vmem:[#allocation2 + $0x8] sm:$0xff]
      %v712 = vld [vmem:[#allocation2 + $0x10] sm:$0xff]
      %v713 = vld [vmem:[#allocation2 + $0x18] sm:$0xff]
      %v714 = vld [vmem:[#allocation2 + $0x20] sm:$0xff]
      %v715 = vld [vmem:[#allocation2 + $0x28] sm:$0xff]
      %v716 = vld [vmem:[#allocation2 + $0x30] sm:$0xff]
      %v717 = vld [vmem:[#allocation2 + $0x38] sm:$0xff]
      %v718 = vld [vmem:[#allocation2 + $0x40] sm:$0xff]
      %v719 = vld [vmem:[#allocation2 + $0x48] sm:$0xff]
      %v720 = vld [vmem:[#allocation2 + $0x50] sm:$0xff]
      %v721 = vld [vmem:[#allocation2 + $0x58] sm:$0xff]
      %v722 = vld [vmem:[#allocation2 + $0x60] sm:$0xff]
      %v723 = vld [vmem:[#allocation2 + $0x68] sm:$0xff]
      %v724 = vld [vmem:[#allocation2 + $0x70] sm:$0xff]
      %v725 = vld [vmem:[#allocation2 + $0x78] sm:$0xff]
      %726 = vmatprep.subr.mxu0 0.0
      %727 = vmatpush1.msra.mxu0 %v710
      %728 = vmatprep.subr.mxu0 0.0
      %729 = vmatpush1.msra.mxu0 %v711
      %730 = vmatprep.subr.mxu0 0.0
      %731 = vmatpush1.msra.mxu0 %v712
      %732 = vmatprep.subr.mxu0 0.0
      %733 = vmatpush1.msra.mxu0 %v713
      %734 = vmatprep.subr.mxu0 0.0
      %735 = vmatpush1.msra.mxu0 %v714
      %736 = vmatprep.subr.mxu0 0.0
      %737 = vmatpush1.msra.mxu0 %v715
      %738 = vmatprep.subr.mxu0 0.0
      %739 = vmatpush1.msra.mxu0 %v716
      %740 = vmatprep.subr.mxu0 0.0
      %741 = vmatpush1.msra.mxu0 %v717
      %742 = vmatprep.subr.mxu0 0.0
      %743 = vmatpush1.msra.mxu0 %v718
      %744 = vmatprep.subr.mxu0 0.0
      %745 = vmatpush1.msra.mxu0 %v719
      %746 = vmatprep.subr.mxu0 0.0
      %747 = vmatpush1.msra.mxu0 %v720
      %748 = vmatprep.subr.mxu0 0.0
      %749 = vmatpush1.msra.mxu0 %v721
      %750 = vmatprep.subr.mxu0 0.0
      %751 = vmatpush1.msra.mxu0 %v722
      %752 = vmatprep.subr.mxu0 0.0
      %753 = vmatpush1.msra.mxu0 %v723
      %754 = vmatprep.subr.mxu0 0.0
      %755 = vmatpush1.msra.mxu0 %v724
      %756 = vmatprep.subr.mxu0 0.0
      %757 = vmatpush1.msra.mxu0 %v725
      %758 = vmatprep.subr.mxu0 0.0
      %759 = vmatpush1.msra.mxu0 0.0
      %760 = vmatprep.subr.mxu0 0.0
      %761 = vmatpush1.msra.mxu0 0.0
      %762 = vmatprep.subr.mxu0 0.0
      %763 = vmatpush1.msra.mxu0 0.0
      %764 = vmatprep.subr.mxu0 0.0
      %765 = vmatpush1.msra.mxu0 0.0
      %766 = vmatprep.subr.mxu0 0.0
      %767 = vmatpush1.msra.mxu0 0.0
      %768 = vmatprep.subr.mxu0 0.0
      %769 = vmatpush1.msra.mxu0 0.0
      %770 = vmatprep.subr.mxu0 0.0
      %771 = vmatpush1.msra.mxu0 0.0
      %772 = vmatprep.subr.mxu0 0.0
      %773 = vmatpush1.msra.mxu0 0.0
      %774 = vmatprep.subr.mxu0 0.0
      %775 = vmatpush1.msra.mxu0 0.0
      %776 = vmatprep.subr.mxu0 0.0
      %777 = vmatpush1.msra.mxu0 0.0
      %778 = vmatprep.subr.mxu0 0.0
      %779 = vmatpush1.msra.mxu0 0.0
      %780 = vmatprep.subr.mxu0 0.0
      %781 = vmatpush1.msra.mxu0 0.0
      %782 = vmatprep.subr.mxu0 0.0
      %783 = vmatpush1.msra.mxu0 0.0
      %784 = vmatprep.subr.mxu0 0.0
      %785 = vmatpush1.msra.mxu0 0.0
      %786 = vmatprep.subr.mxu0 0.0
      %787 = vmatpush1.msra.mxu0 0.0
      %788 = vmatprep.subr.mxu0 0.0
      %789 = vmatpush1.msra.mxu0 0.0
      %790 = vmatprep.mubr.f32.mxu0 0.0
      %791 = vmatmul.mubr.f32.gmra.mrb[0].mxu0 %v709
      %v792 = vpop.f32.mrb[0].mxu0
      %v793 = vadd.f32 0.0, %v792
      %v794 = vpop.f32.mrb[0].mxu0
      %795 = vdwg.mxu0
      %796 = vst [vmem:[%s203] sm:$0xff] %v793
      %797 = vadd.xlane.f32.xlu0 %v793
      %v798 = vpop.xlane.xlu0 %797
      %v799 = vmul.f32 %v798, 0.0078125
      %v800 = vsub.f32 %v793, %v799
      %v801 = vmul.f32 %v800, %v800
      %802 = vadd.xlane.f32.xlu0 %v801
      %v803 = vpop.xlane.xlu0 %802
      %vm804 = vcmask 7168
      %805 = vst.msk [vmem:[%s211] sm:$0xff] %vm804, %v798
      %vm806 = vcmask 15368
      %807 = vst.msk [vmem:[%s211] sm:$0xff] %vm806, %v803
      %p808 = scmp.lt.s32.totalorder %s19, 1
      %s809 = scalar_select %p808, %s19, 1
      %p810 = scmp.lt.s32.totalorder %s20, 1
      %s811 = scalar_select %p810, %s20, 1
      %s812 = smul.addr %s809, 2
      %s813 = sadd.s32 %s811, %s812
      %s814 = smul.addr %s813, 8
      %s815 = scalar_lea.vmem %s2, %s814
      %p816 = scmp.lt.s32.totalorder %s19, 1
      %s817 = scalar_select %p816, %s19, 1
      %p818 = scmp.lt.s32.totalorder %s20, 1
      %s819 = scalar_select %p818, %s20, 1
      %s820 = smul.addr %s817, 2
      %s821 = sadd.s32 %s819, %s820
      %s822 = smul.addr %s821, 8
      %s823 = scalar_lea.vmem %s3, %s822
      // Predicated region
      $region29: #{conv_block_forward.2} parent=27 // pred_check
        %p824 = pneg %p94
      $region30: #{conv_block_forward.2} parent=27 // pred_check_branch
        %826 = sbr.rel (%p824) target = $region32
      $region31: #{conv_block_forward.2} parent=27 // pred_region
        _
      $region32: #{conv_block_forward.2} parent=27 // pred_fallthru
        _
      // Predicated region
      $region33: #{conv_block_forward.2} parent=27 // pred_check
        %p827 = pneg %p122
      $region34: #{conv_block_forward.2} parent=27 // pred_check_branch
        %829 = sbr.rel (%p827) target = $region36
      $region35: #{conv_block_forward.2} parent=27 // pred_region
        _
      $region36: #{conv_block_forward.2} parent=27 // pred_fallthru
        _
    $region28: #{conv_block_forward.2} parent=5 // pred_fallthru
      _
    %p830 = scmp.le.s32.totalorder 2, %s10
    // Predicated region
    $region37: #{conv_block_forward.2} parent=5 // pred_check
      %p831 = pneg %p830
    $region38: #{conv_block_forward.2} parent=5 // pred_check_branch
      %833 = sbr.rel (%p831) target = $region40
    $region39: #{conv_block_forward.2} parent=5 // pred_region
      %s834 = ssub.s32 %s10, 2
      // Predicated region
      $region41: #{conv_block_forward.2} parent=39 // pred_check
        %p835 = pneg %p100
      $region42: #{conv_block_forward.2} parent=39 // pred_check_branch
        %837 = sbr.rel (%p835) target = $region44
      $region43: #{conv_block_forward.2} parent=39 // pred_region
        %p838 = scmp.lt.s32.totalorder %s21, 1
        %s839 = scalar_select %p838, %s21, 1
        %p840 = scmp.lt.s32.totalorder %s22, 1
        %s841 = scalar_select %p840, %s22, 1
        %s842 = smul.addr %s839, 2
        %s843 = sadd.s32 %s841, %s842
        %s844 = smul.addr %s843, 8
        %s845 = scalar_lea.vmem %s2, %s844
      $region44: #{conv_block_forward.2} parent=39 // pred_fallthru
        _
      // Predicated region
      $region45: #{conv_block_forward.2} parent=39 // pred_check
        %p846 = pneg %p128
      $region46: #{conv_block_forward.2} parent=39 // pred_check_branch
        %848 = sbr.rel (%p846) target = $region48
      $region47: #{conv_block_forward.2} parent=39 // pred_region
        %p849 = scmp.lt.s32.totalorder %s21, 1
        %s850 = scalar_select %p849, %s21, 1
        %p851 = scmp.lt.s32.totalorder %s22, 1
        %s852 = scalar_select %p851, %s22, 1
        %s853 = smul.addr %s850, 2
        %s854 = sadd.s32 %s852, %s853
        %s855 = smul.addr %s854, 8
        %s856 = scalar_lea.vmem %s3, %s855
      $region48: #{conv_block_forward.2} parent=39 // pred_fallthru
        _
    $region40: #{conv_block_forward.2} parent=5 // pred_fallthru
      _
  $region6: #{conv_block_forward.2} parent=0 // loop_footer
    %s14 = sadd.s32 1, %s10
  $region7: #{conv_block_forward.2} parent=0 // loop_footer_branch
    %9 = sbr.rel target = $region3
  $region8: #{conv_block_forward.2} parent=0 // loop_exit
    _

</llo_original>
